<compile_context>
chip_gen: v7x
topology: tpu7x:2x2x1
jax: 0.10.0
libtpu: 0.0.40
codegen_flags: <defaults>
</compile_context>

<pallas_src>
import functools

import jax
import jax.numpy as jnp
from jax.experimental import pallas as pl
from jax.experimental.pallas import tpu as pltpu


def _round_up(x, m):
    return ((x + m - 1) // m) * m


def _pick_row_tile(ho, wo, target_rows=512):
    """Largest divisor TH of HO with TH*WO <= ~target_rows and (TH*WO) % 8 == 0."""
    cap = max(1, min(ho, target_rows // max(wo, 1)))
    for d in range(cap, 0, -1):
        if ho % d == 0 and (d * wo) % 8 == 0:
            return d
    return ho  # fallback: full height (block dim == full array dim is allowed)


def _conv_bn_relu_kernel(x_ref, w_ref, s_ref, b_ref, o_ref, acc_ref, *,
                         kh, kw, th, wo):
    """One (batch, row-tile, Cout-tile) output block; ky is the innermost
    'arbitrary' reduction grid axis, kx a static in-kernel loop.

      x_ref  : (1, Hp, Wp, Cinp)  bf16  whole padded image (VMEM-resident per n)
      w_ref  : (1, kw, Cinp, TCO) bf16  kernel taps for this ky / Cout tile
      s_ref  : (1, TCO)           f32   folded BN scale
      b_ref  : (1, TCO)           f32   folded BN bias
      o_ref  : (1, th*wo, TCO)    f32   flat, lane-dense output slab
      acc_ref: (th*wo, TCO)       f32   VMEM scratch accumulator
    """
    hb = pl.program_id(1)
    ky = pl.program_id(3)

    @pl.when(ky == 0)
    def _init():
        acc_ref[...] = jnp.zeros_like(acc_ref)

    h0 = hb * th + ky                          # first padded-input row of tap ky
    for kx in range(kw):                       # static unroll over kernel columns
        win = x_ref[0, pl.ds(h0, th), pl.ds(kx, wo), :]      # (th, wo, Cinp)
        patch = win.reshape(th * wo, win.shape[-1])
        acc_ref[...] += jnp.dot(patch, w_ref[0, kx],
                                preferred_element_type=jnp.float32)

    @pl.when(ky == kh - 1)
    def _finalize():
        y = acc_ref[...] * s_ref[...] + b_ref[...]
        y = jnp.maximum(y, 0.0)
        o_ref[...] = y[None].astype(o_ref.dtype)


def basic_conv2d_forward(x_nchw, w, scale, bias, *, padding=(1, 1),
                         stride=(1, 1), row_tile_target=512, cout_tile=128):
    """Conv2d(bias=False) + folded BatchNorm2d + ReLU.

    x_nchw: (N, Cin, H, W) f32, w: (KH, KW, Cin, Cout) f32,
    scale/bias: (Cout,) f32.  Returns (N, Cout, HO, WO) f32.
    """
    assert stride == (1, 1), "TODO(synk): stride > 1 not implemented"
    n, cin, h, wdt = x_nchw.shape
    kh, kw, cin_w, cout = w.shape
    assert cin_w == cin
    ph, pw = padding
    hp, wp = h + 2 * ph, wdt + 2 * pw
    ho, wo = hp - kh + 1, wp - kw + 1
    assert ho >= 1 and wo >= 1

    cinp = _round_up(max(cin, 1), 128)        # lane-dense K dim
    tco = cout_tile
    coutp = _round_up(max(cout, 1), tco)      # lane-dense output channels
    th = _pick_row_tile(ho, wo, row_tile_target)
    n_hb = ho // th
    n_co = coutp // tco

    # Layout glue: NCHW -> NHWC, fold conv spatial padding + channel padding
    # into one pad, cast MXU operands to bf16 (folded BN stays f32).
    x_nhwc = jnp.transpose(x_nchw, (0, 2, 3, 1))
    x_p = jnp.pad(x_nhwc, ((0, 0), (ph, ph), (pw, pw),
                           (0, cinp - cin))).astype(jnp.bfloat16)
    w_p = jnp.pad(w, ((0, 0), (0, 0), (0, cinp - cin),
                      (0, coutp - cout))).astype(jnp.bfloat16)
    s_p = jnp.pad(scale, (0, coutp - cout)).reshape(1, coutp).astype(jnp.float32)
    b_p = jnp.pad(bias, (0, coutp - cout)).reshape(1, coutp).astype(jnp.float32)

    kernel = functools.partial(_conv_bn_relu_kernel, kh=kh, kw=kw, th=th, wo=wo)

    out_flat = pl.pallas_call(
        kernel,
        out_shape=jax.ShapeDtypeStruct((n, ho * wo, coutp), jnp.float32),
        grid_spec=pltpu.PrefetchScalarGridSpec(
            num_scalar_prefetch=0,
            grid=(n, n_hb, n_co, kh),
            in_specs=[
                # whole padded image: resident across (row-tile, Cout-tile, ky)
                pl.BlockSpec((1, hp, wp, cinp), lambda b, r, c, k: (b, 0, 0, 0)),
                # one ky-row of taps for this Cout tile
                pl.BlockSpec((1, kw, cinp, tco), lambda b, r, c, k: (k, 0, 0, c)),
                pl.BlockSpec((1, tco), lambda b, r, c, k: (0, c)),
                pl.BlockSpec((1, tco), lambda b, r, c, k: (0, c)),
            ],
            out_specs=pl.BlockSpec((1, th * wo, tco),
                                   lambda b, r, c, k: (b, r, c)),
            scratch_shapes=[pltpu.VMEM((th * wo, tco), jnp.float32)],
        ),
        compiler_params=pltpu.CompilerParams(
            dimension_semantics=("parallel", "parallel", "parallel", "arbitrary"),
            vmem_limit_bytes=32 * 1024 * 1024,
        ),
    )(x_p, w_p, s_p, b_p)

    out = out_flat.reshape(n, ho, wo, coutp)[..., :cout]
    return jnp.transpose(out, (0, 3, 1, 2))           # NHWC -> NCHW


# ----------------------------------------------------------------------------
# Deterministic parameter init (conv weight + folded eval-mode BN, eps=1e-3)
# ----------------------------------------------------------------------------

def init_params(key, in_channels, out_channels, kernel_size=3):
    eps = 1e-3  # BatchNorm2d(eps=0.001) per the module
    kk = jax.random.split(key, 5)
    khs = kws = kernel_size
    w = 0.1 * jax.random.normal(kk[0], (khs, kws, in_channels, out_channels),
                                jnp.float32)
    gamma = 1.0 + 0.1 * jax.random.normal(kk[1], (out_channels,), jnp.float32)
    beta = 0.1 * jax.random.normal(kk[2], (out_channels,), jnp.float32)
    mean = 0.1 * jax.random.normal(kk[3], (out_channels,), jnp.float32)
    var = jnp.abs(jax.random.normal(kk[4], (out_channels,), jnp.float32)) + 0.5
    scale = gamma / jnp.sqrt(var + eps)
    bias = beta - mean * scale
    return dict(w=w, scale=scale, bias=bias)


# ----------------------------------------------------------------------------
# Pure-JAX reference (same bf16 operand rounding, f32 accumulation)
# ----------------------------------------------------------------------------

def reference_forward(x_nchw, params, *, padding=(1, 1)):
    w = params["w"]
    kh, kw, _, cout = w.shape
    ph, pw = padding
    x = jnp.transpose(x_nchw, (0, 2, 3, 1))
    xq = x.astype(jnp.bfloat16).astype(jnp.float32)
    wq = w.astype(jnp.bfloat16).astype(jnp.float32)
    xp = jnp.pad(xq, ((0, 0), (ph, ph), (pw, pw), (0, 0)))
    n, hp, wpd, _ = xp.shape
    ho, wo = hp - kh + 1, wpd - kw + 1
    acc = jnp.zeros((n, ho, wo, cout), jnp.float32)
    for ky in range(kh):
        for kx in range(kw):
            acc = acc + jnp.einsum(
                "nhwc,cd->nhwd", xp[:, ky:ky + ho, kx:kx + wo, :], wq[ky, kx],
                precision=jax.lax.Precision.HIGHEST)
    y = jnp.maximum(acc * params["scale"] + params["bias"], 0.0)
    return jnp.transpose(y, (0, 3, 1, 2))


if __name__ == "__main__":
    key = jax.random.PRNGKey(0)
    k_x, k_p = jax.random.split(key)

    batch, in_channels, height, width = 2, 4, 16, 16
    out_channels, ksize, pad = 8, 3, 1

    x = jax.random.normal(k_x, (batch, in_channels, height, width), jnp.float32)
    params = init_params(k_p, in_channels, out_channels, ksize)

    fwd = jax.jit(functools.partial(basic_conv2d_forward, padding=(pad, pad)))
    out = fwd(x, params["w"], params["scale"], params["bias"])
    out = jax.block_until_ready(out)
    assert out.shape == (batch, out_channels, height, width), out.shape

    ref = reference_forward(x, params, padding=(pad, pad))
    max_err = float(jnp.max(jnp.abs(out - ref)))
    assert jnp.allclose(out, ref, atol=2e-3, rtol=2e-3), max_err

    print("KERNEL_OK")
</pallas_src>

<mosaic_0001>
module attributes {stable_mosaic.version = 11 : i64} {
  func.func @_conv_bn_relu_kernel(%arg0: i32, %arg1: i32, %arg2: i32, %arg3: i32, %arg4: memref<1x18x18x128xbf16, #tpu.memory_space<vmem>>, %arg5: memref<1x3x128x128xbf16, #tpu.memory_space<vmem>>, %arg6: memref<1x128xf32, #tpu.memory_space<vmem>>, %arg7: memref<1x128xf32, #tpu.memory_space<vmem>>, %arg8: memref<1x256x128xf32, #tpu.memory_space<vmem>>, %arg9: memref<256x128xf32, #tpu.memory_space<vmem>>) attributes {dimension_semantics = [#tpu.dimension_semantics<parallel>, #tpu.dimension_semantics<parallel>, #tpu.dimension_semantics<parallel>, #tpu.dimension_semantics<arbitrary>], iteration_bounds = array<i64: 2, 1, 1, 3>, scalar_prefetch = 0 : i64, scratch_operands = 1 : i64, tpu.core_type = #tpu.core_type<tc>, window_params = [{transform_indices = @transform_0, window_bounds = array<i64: 1, 18, 18, 128>}, {transform_indices = @transform_1, window_bounds = array<i64: 1, 3, 128, 128>}, {transform_indices = @transform_2, window_bounds = array<i64: 1, 128>}, {transform_indices = @transform_3, window_bounds = array<i64: 1, 128>}, {transform_indices = @transform_4, window_bounds = array<i64: 1, 256, 128>}]} {
    %c0_i32 = arith.constant 0 : i32
    %0 = arith.cmpi eq, %arg3, %c0_i32 : i32
    %1 = arith.extui %0 : i1 to i32
    %c0_i32_0 = arith.constant 0 : i32
    %2 = arith.cmpi ne, %1, %c0_i32_0 : i32
    scf.if %2 {
      %cst_34 = arith.constant 0.000000e+00 : f32
      %38 = vector.broadcast %cst_34 : f32 to vector<256x128xf32>
      %c0_35 = arith.constant 0 : index
      %c0_36 = arith.constant 0 : index
      %39 = vector.load %arg9[%c0_35, %c0_36] : memref<256x128xf32, #tpu.memory_space<vmem>>, vector<256x128xf32>
      tpu.vector_store %arg9[%c0_35, %c0_36], %38 {strides = array<i32>} : memref<256x128xf32, #tpu.memory_space<vmem>>, vector<256x128xf32>,
    } else {
    }
    %c16_i32 = arith.constant 16 : i32
    %3 = arith.muli %arg1, %c16_i32 : i32
    %4 = arith.addi %3, %arg3 : i32
    %c0 = arith.constant 0 : index
    %5 = arith.index_cast %4 : i32 to index
    %c0_1 = arith.constant 0 : index
    %c0_2 = arith.constant 0 : index
    %6 = vector.load %arg4[%c0, %5, %c0_1, %c0_2] : memref<1x18x18x128xbf16, #tpu.memory_space<vmem>>, vector<1x16x16x128xbf16>
    %7 = vector.shape_cast %6 : vector<1x16x16x128xbf16> to vector<16x16x128xbf16>
    %8 = vector.shape_cast %7 : vector<16x16x128xbf16> to vector<256x128xbf16>
    %c0_3 = arith.constant 0 : index
    %c0_4 = arith.constant 0 : index
    %9 = vector.load %arg9[%c0_3, %c0_4] : memref<256x128xf32, #tpu.memory_space<vmem>>, vector<256x128xf32>
    %c0_5 = arith.constant 0 : index
    %c0_6 = arith.constant 0 : index
    %c0_7 = arith.constant 0 : index
    %c0_8 = arith.constant 0 : index
    %10 = vector.load %arg5[%c0_5, %c0_6, %c0_7, %c0_8] : memref<1x3x128x128xbf16, #tpu.memory_space<vmem>>, vector<1x1x128x128xbf16>
    %11 = vector.shape_cast %10 : vector<1x1x128x128xbf16> to vector<128x128xbf16>
    %cst = arith.constant dense<0.000000e+00> : vector<256x128xf32>
    %12 = tpu.matmul %8, %11, %cst {dimension_numbers = #tpu.dot_dimension_numbers<[1], [0], [0], [1], [0, 0, 1, 1], [], []>} : vector<256x128xbf16>, vector<128x128xbf16>, vector<256x128xf32> -> vector<256x128xf32>
    %13 = arith.addf %9, %12 : vector<256x128xf32>
    %c0_9 = arith.constant 0 : index
    %c0_10 = arith.constant 0 : index
    %14 = vector.load %arg9[%c0_9, %c0_10] : memref<256x128xf32, #tpu.memory_space<vmem>>, vector<256x128xf32>
    tpu.vector_store %arg9[%c0_9, %c0_10], %13 {strides = array<i32>} : memref<256x128xf32, #tpu.memory_space<vmem>>, vector<256x128xf32>,
    %c0_11 = arith.constant 0 : index
    %15 = arith.index_cast %4 : i32 to index
    %c1 = arith.constant 1 : index
    %c0_12 = arith.constant 0 : index
    %16 = vector.load %arg4[%c0_11, %15, %c1, %c0_12] : memref<1x18x18x128xbf16, #tpu.memory_space<vmem>>, vector<1x16x16x128xbf16>
    %17 = vector.shape_cast %16 : vector<1x16x16x128xbf16> to vector<16x16x128xbf16>
    %18 = vector.shape_cast %17 : vector<16x16x128xbf16> to vector<256x128xbf16>
    %c0_13 = arith.constant 0 : index
    %c0_14 = arith.constant 0 : index
    %19 = vector.load %arg9[%c0_13, %c0_14] : memref<256x128xf32, #tpu.memory_space<vmem>>, vector<256x128xf32>
    %c0_15 = arith.constant 0 : index
    %c1_16 = arith.constant 1 : index
    %c0_17 = arith.constant 0 : index
    %c0_18 = arith.constant 0 : index
    %20 = vector.load %arg5[%c0_15, %c1_16, %c0_17, %c0_18] : memref<1x3x128x128xbf16, #tpu.memory_space<vmem>>, vector<1x1x128x128xbf16>
    %21 = vector.shape_cast %20 : vector<1x1x128x128xbf16> to vector<128x128xbf16>
    %cst_19 = arith.constant dense<0.000000e+00> : vector<256x128xf32>
    %22 = tpu.matmul %18, %21, %cst_19 {dimension_numbers = #tpu.dot_dimension_numbers<[1], [0], [0], [1], [0, 0, 1, 1], [], []>} : vector<256x128xbf16>, vector<128x128xbf16>, vector<256x128xf32> -> vector<256x128xf32>
    %23 = arith.addf %19, %22 : vector<256x128xf32>
    %c0_20 = arith.constant 0 : index
    %c0_21 = arith.constant 0 : index
    %24 = vector.load %arg9[%c0_20, %c0_21] : memref<256x128xf32, #tpu.memory_space<vmem>>, vector<256x128xf32>
    tpu.vector_store %arg9[%c0_20, %c0_21], %23 {strides = array<i32>} : memref<256x128xf32, #tpu.memory_space<vmem>>, vector<256x128xf32>,
    %c0_22 = arith.constant 0 : index
    %25 = arith.index_cast %4 : i32 to index
    %c2 = arith.constant 2 : index
    %c0_23 = arith.constant 0 : index
    %26 = vector.load %arg4[%c0_22, %25, %c2, %c0_23] : memref<1x18x18x128xbf16, #tpu.memory_space<vmem>>, vector<1x16x16x128xbf16>
    %27 = vector.shape_cast %26 : vector<1x16x16x128xbf16> to vector<16x16x128xbf16>
    %28 = vector.shape_cast %27 : vector<16x16x128xbf16> to vector<256x128xbf16>
    %c0_24 = arith.constant 0 : index
    %c0_25 = arith.constant 0 : index
    %29 = vector.load %arg9[%c0_24, %c0_25] : memref<256x128xf32, #tpu.memory_space<vmem>>, vector<256x128xf32>
    %c0_26 = arith.constant 0 : index
    %c2_27 = arith.constant 2 : index
    %c0_28 = arith.constant 0 : index
    %c0_29 = arith.constant 0 : index
    %30 = vector.load %arg5[%c0_26, %c2_27, %c0_28, %c0_29] : memref<1x3x128x128xbf16, #tpu.memory_space<vmem>>, vector<1x1x128x128xbf16>
    %31 = vector.shape_cast %30 : vector<1x1x128x128xbf16> to vector<128x128xbf16>
    %cst_30 = arith.constant dense<0.000000e+00> : vector<256x128xf32>
    %32 = tpu.matmul %28, %31, %cst_30 {dimension_numbers = #tpu.dot_dimension_numbers<[1], [0], [0], [1], [0, 0, 1, 1], [], []>} : vector<256x128xbf16>, vector<128x128xbf16>, vector<256x128xf32> -> vector<256x128xf32>
    %33 = arith.addf %29, %32 : vector<256x128xf32>
    %c0_31 = arith.constant 0 : index
    %c0_32 = arith.constant 0 : index
    %34 = vector.load %arg9[%c0_31, %c0_32] : memref<256x128xf32, #tpu.memory_space<vmem>>, vector<256x128xf32>
    tpu.vector_store %arg9[%c0_31, %c0_32], %33 {strides = array<i32>} : memref<256x128xf32, #tpu.memory_space<vmem>>, vector<256x128xf32>,
    %c2_i32 = arith.constant 2 : i32
    %35 = arith.cmpi eq, %arg3, %c2_i32 : i32
    %36 = arith.extui %35 : i1 to i32
    %c0_i32_33 = arith.constant 0 : i32
    %37 = arith.cmpi ne, %36, %c0_i32_33 : i32
    scf.if %37 {
      %c0_34 = arith.constant 0 : index
      %c0_35 = arith.constant 0 : index
      %38 = vector.load %arg9[%c0_34, %c0_35] : memref<256x128xf32, #tpu.memory_space<vmem>>, vector<256x128xf32>
      %c0_36 = arith.constant 0 : index
      %c0_37 = arith.constant 0 : index
      %39 = vector.load %arg6[%c0_36, %c0_37] : memref<1x128xf32, #tpu.memory_space<vmem>>, vector<1x128xf32>
      %40 = vector.broadcast %39 : vector<1x128xf32> to vector<256x128xf32>
      %41 = arith.mulf %38, %40 : vector<256x128xf32>
      %c0_38 = arith.constant 0 : index
      %c0_39 = arith.constant 0 : index
      %42 = vector.load %arg7[%c0_38, %c0_39] : memref<1x128xf32, #tpu.memory_space<vmem>>, vector<1x128xf32>
      %43 = vector.broadcast %42 : vector<1x128xf32> to vector<256x128xf32>
      %44 = arith.addf %41, %43 : vector<256x128xf32>
      %cst_40 = arith.constant 0.000000e+00 : f32
      %45 = vector.broadcast %cst_40 : f32 to vector<256x128xf32>
      %46 = arith.maximumf %44, %45 : vector<256x128xf32>
      %47 = vector.shape_cast %46 : vector<256x128xf32> to vector<1x256x128xf32>
      %c0_41 = arith.constant 0 : index
      %c0_42 = arith.constant 0 : index
      %c0_43 = arith.constant 0 : index
      %48 = vector.load %arg8[%c0_41, %c0_42, %c0_43] : memref<1x256x128xf32, #tpu.memory_space<vmem>>, vector<1x256x128xf32>
      tpu.vector_store %arg8[%c0_41, %c0_42, %c0_43], %47 {strides = array<i32>} : memref<1x256x128xf32, #tpu.memory_space<vmem>>, vector<1x256x128xf32>,
    } else {
    }
    return
  }
  func.func @transform_0(%arg0: i32, %arg1: i32, %arg2: i32, %arg3: i32) -> (i32, i32, i32, i32) {
    %c0_i32 = arith.constant 0 : i32
    %c0_i32_0 = arith.constant 0 : i32
    %c0_i32_1 = arith.constant 0 : i32
    %c0_i32_2 = arith.constant 0 : i32
    return %arg0, %c0_i32, %c0_i32_0, %c0_i32_1 : i32, i32, i32, i32
  }
  func.func @transform_1(%arg0: i32, %arg1: i32, %arg2: i32, %arg3: i32) -> (i32, i32, i32, i32) {
    %c0_i32 = arith.constant 0 : i32
    %c0_i32_0 = arith.constant 0 : i32
    %c0_i32_1 = arith.constant 0 : i32
    return %arg3, %c0_i32, %c0_i32_0, %arg2 : i32, i32, i32, i32
  }
  func.func @transform_2(%arg0: i32, %arg1: i32, %arg2: i32, %arg3: i32) -> (i32, i32) {
    %c0_i32 = arith.constant 0 : i32
    %c0_i32_0 = arith.constant 0 : i32
    return %c0_i32, %arg2 : i32, i32
  }
  func.func @transform_3(%arg0: i32, %arg1: i32, %arg2: i32, %arg3: i32) -> (i32, i32) {
    %c0_i32 = arith.constant 0 : i32
    %c0_i32_0 = arith.constant 0 : i32
    return %c0_i32, %arg2 : i32, i32
  }
  func.func @transform_4(%arg0: i32, %arg1: i32, %arg2: i32, %arg3: i32) -> (i32, i32, i32) {
    %c0_i32 = arith.constant 0 : i32
    return %arg0, %arg1, %arg2 : i32, i32, i32
  }
}

</mosaic_0001>

<llo_original>
// kernel: basic_conv2d_forward.1
$region0: #{basic_conv2d_forward.1}
  #allocation0 [shape = 'u32[]', space=smem, size = 0x4, offset = 0x4, fixed_abs, tag = 'smem constant byte address 0x4 - core index']
  #allocation1 [shape = 'u32[144,128]{1,0:T(1,128)}', space=vmem, size = 0x12000, scoped, tag = 'internal scratch']
  #allocation2 [shape = 'f32[256,128]{1,0:T(8,128)}', space=vmem, size = 0x20000, scoped, tag = 'scratch operand']
  %s0 = inlined_call_operand.vmem [shape: bf16[2,18,18,128], index: 0, kind: input, shape index: {}]
  %s1 = inlined_call_operand.vmem [shape: bf16[3,3,128,128], index: 1, kind: input, shape index: {}]
  %s2 = inlined_call_operand.vmem [shape: f32[1,128], index: 2, kind: input, shape index: {}]
  %s3 = inlined_call_operand.vmem [shape: f32[1,128], index: 3, kind: input, shape index: {}]
  %s4 = inlined_call_operand.vmem [shape: f32[2,256,128], index: 4, kind: output, shape index: {}]
  %s5 = sld [smem:[#allocation0]]
  $region57: #{basic_conv2d_forward.1} parent=0
    _
  %s7 = ssub.s32 1, %s5
  %s8 = scalar_select 0, %s7, %s5
  loop: start=0, step=1, limit=8
  $region2: #{basic_conv2d_forward.1} parent=0 // loop_pre_header
    _
  $region3: #{basic_conv2d_forward.1} parent=0 // loop_header
    %s10 = sphi 0, %s14
    %p11 = scmp.ge.s32.totalorder %s10, 8
    %s17 = sphi 0, %s43
    %s18 = sphi 0, %s39
    %s19 = sphi 0, %s35
    %s20 = sphi 0, %s31
    %s21 = sphi 0, %s17
    %s22 = sphi 0, %s18
    %s23 = sphi 0, %s19
    %s24 = sphi 0, %s20
    %s25 = sphi 0, %s21
    %s26 = sphi 0, %s22
    %s27 = sphi 0, %s23
    %s28 = sphi 0, %s24
    %s46 = sphi 0, %s48
    %s49 = sphi 0, %s46
    %s50 = sphi 0, %s49
    %s66 = sphi 0, %s50
    %s74 = sphi 0, %s76
    %s77 = sphi 0, %s74
    %s78 = sphi 0, %s77
    %s94 = sphi 0, %s78
    %s100 = sphi 0, %s102
    %s103 = sphi 0, %s100
    %s104 = sphi 0, %s103
    %s120 = sphi 0, %s104
    %s126 = sphi 0, %s128
    %s129 = sphi 0, %s126
    %s130 = sphi 0, %s129
    %s146 = sphi 0, %s130
    %s156 = sphi 0, %s158
    %s159 = sphi 0, %s156
    %s160 = sphi 0, %s159
    %s176 = sphi 0, %s160
  $region4: #{basic_conv2d_forward.1} parent=0 // loop_header_branch
    %13 = sbr.rel (%p11) target = $region8
  $region5: #{basic_conv2d_forward.1} parent=0 // loop_body
    %s15 = ssub.s32 %s10, 1
    %s16 = ssub.s32 %s10, 2
    %s29 = sadd.s32 1, %s20
    %p30 = scmp.ge.s32.totalorder %s29, 3
    %s31 = scalar_select %p30, 0, %s29
    %s32 = sadd.s32 1, %s19
    %s33 = scalar_select %p30, %s32, %s19
    %p34 = scmp.ge.s32.totalorder %s33, 1
    %s35 = scalar_select %p34, 0, %s33
    %s36 = sadd.s32 1, %s18
    %s37 = scalar_select %p34, %s36, %s18
    %p38 = scmp.ge.s32.totalorder %s37, 1
    %s39 = scalar_select %p38, 0, %s37
    %s40 = sadd.s32 1, %s17
    %s41 = scalar_select %p38, %s40, %s17
    %p42 = scmp.ge.s32.totalorder %s41, 2
    %s43 = scalar_select %p42, 0, %s41
    %s44 = ssub.s32 %s17, %s43
    %p45 = scmp.eq.s32.totalorder %s44, 0
    %s47 = sadd.s32 %s46, 1
    %s48 = scalar_select %p45, %s46, %s47
    %p51 = pneg %p45
    %p52 = scmp.eq.s32.totalorder %s10, 5
    %p53 = por %p51, %p52
    %p54 = scmp.ne.s32.totalorder %s46, %s49
    %p55 = scmp.eq.s32.totalorder %s10, 0
    %p56 = por %p54, %p55
    %p57 = scmp.ne.s32.totalorder %s46, %s49
    %p58 = scmp.eq.s32.totalorder %s15, 5
    %p59 = por %p57, %p58
    %p60 = scmp.ne.s32.totalorder %s49, %s50
    %p61 = scmp.eq.s32.totalorder %s15, 0
    %p62 = por %p60, %p61
    %p63 = scmp.ne.s32.totalorder %s49, %s50
    %p64 = scmp.eq.s32.totalorder %s16, 5
    %p65 = por %p63, %p64
    %p67 = scmp.ne.s32.totalorder %s50, %s66
    %p68 = scmp.eq.s32.totalorder %s16, 0
    %p69 = por %p67, %p68
    %s70 = ssub.s32 %s20, %s31
    %s71 = ssub.s32 %s19, %s35
    %s72 = sor.u32 %s70, %s71
    %p73 = scmp.eq.s32.totalorder %s72, 0
    %s75 = sadd.s32 %s74, 1
    %s76 = scalar_select %p73, %s74, %s75
    %p79 = pneg %p73
    %p80 = scmp.eq.s32.totalorder %s10, 5
    %p81 = por %p79, %p80
    %p82 = scmp.ne.s32.totalorder %s74, %s77
    %p83 = scmp.eq.s32.totalorder %s10, 0
    %p84 = por %p82, %p83
    %p85 = scmp.ne.s32.totalorder %s74, %s77
    %p86 = scmp.eq.s32.totalorder %s15, 5
    %p87 = por %p85, %p86
    %p88 = scmp.ne.s32.totalorder %s77, %s78
    %p89 = scmp.eq.s32.totalorder %s15, 0
    %p90 = por %p88, %p89
    %p91 = scmp.ne.s32.totalorder %s77, %s78
    %p92 = scmp.eq.s32.totalorder %s16, 5
    %p93 = por %p91, %p92
    %p95 = scmp.ne.s32.totalorder %s78, %s94
    %p96 = scmp.eq.s32.totalorder %s16, 0
    %p97 = por %p95, %p96
    %s98 = ssub.s32 %s19, %s35
    %p99 = scmp.eq.s32.totalorder %s98, 0
    %s101 = sadd.s32 %s100, 1
    %s102 = scalar_select %p99, %s100, %s101
    %p105 = pneg %p99
    %p106 = scmp.eq.s32.totalorder %s10, 5
    %p107 = por %p105, %p106
    %p108 = scmp.ne.s32.totalorder %s100, %s103
    %p109 = scmp.eq.s32.totalorder %s10, 0
    %p110 = por %p108, %p109
    %p111 = scmp.ne.s32.totalorder %s100, %s103
    %p112 = scmp.eq.s32.totalorder %s15, 5
    %p113 = por %p111, %p112
    %p114 = scmp.ne.s32.totalorder %s103, %s104
    %p115 = scmp.eq.s32.totalorder %s15, 0
    %p116 = por %p114, %p115
    %p117 = scmp.ne.s32.totalorder %s103, %s104
    %p118 = scmp.eq.s32.totalorder %s16, 5
    %p119 = por %p117, %p118
    %p121 = scmp.ne.s32.totalorder %s104, %s120
    %p122 = scmp.eq.s32.totalorder %s16, 0
    %p123 = por %p121, %p122
    %s124 = ssub.s32 %s19, %s35
    %p125 = scmp.eq.s32.totalorder %s124, 0
    %s127 = sadd.s32 %s126, 1
    %s128 = scalar_select %p125, %s126, %s127
    %p131 = pneg %p125
    %p132 = scmp.eq.s32.totalorder %s10, 5
    %p133 = por %p131, %p132
    %p134 = scmp.ne.s32.totalorder %s126, %s129
    %p135 = scmp.eq.s32.totalorder %s10, 0
    %p136 = por %p134, %p135
    %p137 = scmp.ne.s32.totalorder %s126, %s129
    %p138 = scmp.eq.s32.totalorder %s15, 5
    %p139 = por %p137, %p138
    %p140 = scmp.ne.s32.totalorder %s129, %s130
    %p141 = scmp.eq.s32.totalorder %s15, 0
    %p142 = por %p140, %p141
    %p143 = scmp.ne.s32.totalorder %s129, %s130
    %p144 = scmp.eq.s32.totalorder %s16, 5
    %p145 = por %p143, %p144
    %p147 = scmp.ne.s32.totalorder %s130, %s146
    %p148 = scmp.eq.s32.totalorder %s16, 0
    %p149 = por %p147, %p148
    %s150 = ssub.s32 %s17, %s43
    %s151 = ssub.s32 %s18, %s39
    %s152 = sor.u32 %s150, %s151
    %s153 = ssub.s32 %s19, %s35
    %s154 = sor.u32 %s152, %s153
    %p155 = scmp.eq.s32.totalorder %s154, 0
    %s157 = sadd.s32 %s156, 1
    %s158 = scalar_select %p155, %s156, %s157
    %p161 = pneg %p155
    %p162 = scmp.eq.s32.totalorder %s10, 5
    %p163 = por %p161, %p162
    %p164 = scmp.ne.s32.totalorder %s156, %s159
    %p165 = scmp.eq.s32.totalorder %s10, 0
    %p166 = por %p164, %p165
    %p167 = scmp.ne.s32.totalorder %s156, %s159
    %p168 = scmp.eq.s32.totalorder %s15, 5
    %p169 = por %p167, %p168
    %p170 = scmp.ne.s32.totalorder %s159, %s160
    %p171 = scmp.eq.s32.totalorder %s15, 0
    %p172 = por %p170, %p171
    %p173 = scmp.ne.s32.totalorder %s159, %s160
    %p174 = scmp.eq.s32.totalorder %s16, 5
    %p175 = por %p173, %p174
    %p177 = scmp.ne.s32.totalorder %s160, %s176
    %p178 = scmp.eq.s32.totalorder %s16, 0
    %p179 = por %p177, %p178
    %p180 = scmp.le.s32.totalorder 1, %s10
    %p181 = scmp.lt.s32.totalorder %s10, 7
    %p182 = pnand %p180, %p181
    %p183 = pneg %p182
    // Predicated region
    $region9: #{basic_conv2d_forward.1} parent=5 // pred_check
      _
    $region10: #{basic_conv2d_forward.1} parent=5 // pred_check_branch
      %185 = sbr.rel (%p182) target = $region12
    $region11: #{basic_conv2d_forward.1} parent=5 // pred_region
      %s186 = ssub.s32 %s10, 1
      // Predicated region
      $region13: #{basic_conv2d_forward.1} parent=11 // pred_check
        %p187 = pneg %p116
      $region14: #{basic_conv2d_forward.1} parent=11 // pred_check_branch
        %189 = sbr.rel (%p187) target = $region16
      $region15: #{basic_conv2d_forward.1} parent=11 // pred_region
        %p190 = scmp.lt.s32.totalorder %s23, 0
        %s191 = scalar_select %p190, %s23, 0
        %s192 = scalar_lea.vmem %s2, %s191
      $region16: #{basic_conv2d_forward.1} parent=11 // pred_fallthru
        _
      // Predicated region
      $region17: #{basic_conv2d_forward.1} parent=11 // pred_check
        %p193 = pneg %p142
      $region18: #{basic_conv2d_forward.1} parent=11 // pred_check_branch
        %195 = sbr.rel (%p193) target = $region20
      $region19: #{basic_conv2d_forward.1} parent=11 // pred_region
        %p196 = scmp.lt.s32.totalorder %s23, 0
        %s197 = scalar_select %p196, %s23, 0
        %s198 = scalar_lea.vmem %s3, %s197
      $region20: #{basic_conv2d_forward.1} parent=11 // pred_fallthru
        _
    $region12: #{basic_conv2d_forward.1} parent=5 // pred_fallthru
      _
    %p199 = scmp.lt.s32.totalorder %s10, 6
    // Predicated region
    $region21: #{basic_conv2d_forward.1} parent=5 // pred_check
      %p200 = pneg %p199
    $region22: #{basic_conv2d_forward.1} parent=5 // pred_check_branch
      %202 = sbr.rel (%p200) target = $region24
    $region23: #{basic_conv2d_forward.1} parent=5 // pred_region
      // Predicated region
      $region25: #{basic_conv2d_forward.1} parent=23 // pred_check
        %p203 = pneg %p56
      $region26: #{basic_conv2d_forward.1} parent=23 // pred_check_branch
        %205 = sbr.rel (%p203) target = $region28
      $region27: #{basic_conv2d_forward.1} parent=23 // pred_region
        %p206 = scmp.lt.s32.totalorder %s17, 1
        %s207 = scalar_select %p206, %s17, 1
        %s208 = smul.addr %s207, 54
        %s209 = smul.addr %s208, 4
        %s210 = scalar_lea.vmem %s0, %s209
      $region28: #{basic_conv2d_forward.1} parent=23 // pred_fallthru
        _
      // Predicated region
      $region29: #{basic_conv2d_forward.1} parent=23 // pred_check
        %p211 = pneg %p84
      $region30: #{basic_conv2d_forward.1} parent=23 // pred_check_branch
        %213 = sbr.rel (%p211) target = $region32
      $region31: #{basic_conv2d_forward.1} parent=23 // pred_region
        %p214 = scmp.lt.s32.totalorder %s20, 2
        %s215 = scalar_select %p214, %s20, 2
        %p216 = scmp.lt.s32.totalorder %s19, 0
        %s217 = scalar_select %p216, %s19, 0
        %s218 = smul.addr %s215, 48
        %s219 = sadd.s32 %s217, %s218
        %s220 = smul.addr %s219, 4
        %s221 = scalar_lea.vmem %s1, %s220
      $region32: #{basic_conv2d_forward.1} parent=23 // pred_fallthru
        _
    $region24: #{basic_conv2d_forward.1} parent=5 // pred_fallthru
      _
    %p222 = scmp.le.s32.totalorder 1, %s10
    %p223 = scmp.lt.s32.totalorder %s10, 7
    %p224 = pnand %p222, %p223
    %p225 = pneg %p224
    // Predicated region
    $region33: #{basic_conv2d_forward.1} parent=5 // pred_check
      _
    $region34: #{basic_conv2d_forward.1} parent=5 // pred_check_branch
      %227 = sbr.rel (%p224) target = $region36
    $region35: #{basic_conv2d_forward.1} parent=5 // pred_region
      %s228 = ssub.s32 %s10, 1
      %p229 = scmp.lt.s32.totalorder %s21, 1
      %s230 = scalar_select %p229, %s21, 1
      %s231 = smul.addr %s230, 54
      %s232 = smul.addr %s231, 4
      %s233 = scalar_lea.vmem %s0, %s232
      %p234 = pneg %p62
      %p235 = pneg %p59
      %p236 = scmp.lt.s32.totalorder %s24, 2
      %s237 = scalar_select %p236, %s24, 2
      %p238 = scmp.lt.s32.totalorder %s23, 0
      %s239 = scalar_select %p238, %s23, 0
      %s240 = smul.addr %s237, 48
      %s241 = sadd.s32 %s239, %s240
      %s242 = smul.addr %s241, 4
      %s243 = scalar_lea.vmem %s1, %s242
      %p244 = pneg %p90
      %p245 = pneg %p87
      %p246 = scmp.lt.s32.totalorder %s23, 0
      %s247 = scalar_select %p246, %s23, 0
      %s248 = scalar_lea.vmem %s2, %s247
      %p249 = pneg %p116
      %p250 = pneg %p113
      %p251 = scmp.lt.s32.totalorder %s23, 0
      %s252 = scalar_select %p251, %s23, 0
      %s253 = scalar_lea.vmem %s3, %s252
      %p254 = pneg %p142
      %p255 = pneg %p139
      %p256 = pneg %p172
      %p257 = pneg %p169
      %s258 = smul.u32 32, %s22
      %p259 = scmp.lt.s32.totalorder %s21, 1
      %s260 = scalar_select %p259, %s21, 1
      %p261 = scmp.lt.s32.totalorder %s258, 31
      %s262 = scalar_select %p261, %s258, 31
      %p263 = scmp.lt.s32.totalorder %s23, 0
      %s264 = scalar_select %p263, %s23, 0
      %s265 = sadd.s32 %s264, %s262
      %s266 = smul.addr %s260, 32
      %s267 = sadd.s32 %s265, %s266
      %s268 = smul.addr %s267, 8
      %s269 = scalar_lea.vmem %s4, %s268
      %p270 = scmp.lt.s32.totalorder %s21, 1
      %s271 = scalar_select %p270, %s21, 1
      %s272 = smul.addr %s271, 54
      %s273 = smul.addr %s272, 4
      %s274 = scalar_lea.vmem %s0, %s273
      %p275 = scmp.lt.s32.totalorder %s24, 2
      %s276 = scalar_select %p275, %s24, 2
      %p277 = scmp.lt.s32.totalorder %s23, 0
      %s278 = scalar_select %p277, %s23, 0
      %s279 = smul.addr %s276, 48
      %s280 = sadd.s32 %s278, %s279
      %s281 = smul.addr %s280, 4
      %s282 = scalar_lea.vmem %s1, %s281
      %p283 = scmp.lt.s32.totalorder %s23, 0
      %s284 = scalar_select %p283, %s23, 0
      %s285 = scalar_lea.vmem %s2, %s284
      %p286 = scmp.lt.s32.totalorder %s23, 0
      %s287 = scalar_select %p286, %s23, 0
      %s288 = scalar_lea.vmem %s3, %s287
      %s289 = smul.u32 32, %s22
      %p290 = scmp.lt.s32.totalorder %s21, 1
      %s291 = scalar_select %p290, %s21, 1
      %p292 = scmp.lt.s32.totalorder %s289, 31
      %s293 = scalar_select %p292, %s289, 31
      %p294 = scmp.lt.s32.totalorder %s23, 0
      %s295 = scalar_select %p294, %s23, 0
      %s296 = sadd.s32 %s295, %s293
      %s297 = smul.addr %s291, 32
      %s298 = sadd.s32 %s296, %s297
      %s299 = smul.addr %s298, 8
      %s300 = scalar_lea.vmem %s4, %s299
      %s301 = smul.u32 32, %s22
      %p303 = scmp.eq.s32.totalorder %s24, 0
      // Predicated region
      $region37: #{basic_conv2d_forward.1} parent=35 // pred_check
        %p304 = pneg %p303
      $region38: #{basic_conv2d_forward.1} parent=35 // pred_check_branch
        %306 = sbr.rel (%p304) target = $region40
      $region39: #{basic_conv2d_forward.1} parent=35 // pred_region
        %307 = vst [vmem:[#allocation2] sm:$0xff] 0.0
        %308 = vst [vmem:[#allocation2 + $0x8] sm:$0xff] 0.0
        %309 = vst [vmem:[#allocation2 + $0x10] sm:$0xff] 0.0
        %310 = vst [vmem:[#allocation2 + $0x18] sm:$0xff] 0.0
        %311 = vst [vmem:[#allocation2 + $0x20] sm:$0xff] 0.0
        %312 = vst [vmem:[#allocation2 + $0x28] sm:$0xff] 0.0
        %313 = vst [vmem:[#allocation2 + $0x30] sm:$0xff] 0.0
        %314 = vst [vmem:[#allocation2 + $0x38] sm:$0xff] 0.0
        %315 = vst [vmem:[#allocation2 + $0x40] sm:$0xff] 0.0
        %316 = vst [vmem:[#allocation2 + $0x48] sm:$0xff] 0.0
        %317 = vst [vmem:[#allocation2 + $0x50] sm:$0xff] 0.0
        %318 = vst [vmem:[#allocation2 + $0x58] sm:$0xff] 0.0
        %319 = vst [vmem:[#allocation2 + $0x60] sm:$0xff] 0.0
        %320 = vst [vmem:[#allocation2 + $0x68] sm:$0xff] 0.0
        %321 = vst [vmem:[#allocation2 + $0x70] sm:$0xff] 0.0
        %322 = vst [vmem:[#allocation2 + $0x78] sm:$0xff] 0.0
        %323 = vst [vmem:[#allocation2 + $0x80] sm:$0xff] 0.0
        %324 = vst [vmem:[#allocation2 + $0x88] sm:$0xff] 0.0
        %325 = vst [vmem:[#allocation2 + $0x90] sm:$0xff] 0.0
        %326 = vst [vmem:[#allocation2 + $0x98] sm:$0xff] 0.0
        %327 = vst [vmem:[#allocation2 + $0xa0] sm:$0xff] 0.0
        %328 = vst [vmem:[#allocation2 + $0xa8] sm:$0xff] 0.0
        %329 = vst [vmem:[#allocation2 + $0xb0] sm:$0xff] 0.0
        %330 = vst [vmem:[#allocation2 + $0xb8] sm:$0xff] 0.0
        %331 = vst [vmem:[#allocation2 + $0xc0] sm:$0xff] 0.0
        %332 = vst [vmem:[#allocation2 + $0xc8] sm:$0xff] 0.0
        %333 = vst [vmem:[#allocation2 + $0xd0] sm:$0xff] 0.0
        %334 = vst [vmem:[#allocation2 + $0xd8] sm:$0xff] 0.0
        %335 = vst [vmem:[#allocation2 + $0xe0] sm:$0xff] 0.0
        %336 = vst [vmem:[#allocation2 + $0xe8] sm:$0xff] 0.0
        %337 = vst [vmem:[#allocation2 + $0xf0] sm:$0xff] 0.0
        %338 = vst [vmem:[#allocation2 + $0xf8] sm:$0xff] 0.0
      $region40: #{basic_conv2d_forward.1} parent=35 // pred_fallthru
        _
      %s339 = smul.u32 %s22, 16
      %s340 = sadd.s32 %s339, %s24
      %s341 = smul.u32 %s340, 3
      %s342 = smul.addr %s341, 4
      %s343 = scalar_lea.vmem %s274, %s342
      %v344 = vld [vmem:[%s343] sm:$0xf]
      %v345 = vld [vmem:[%s343 + $0x4] sm:$0xf]
      %v346 = vld [vmem:[%s343 + $0xc] sm:$0xf]
      %v347 = vld [vmem:[%s343 + $0x10] sm:$0xf]
      %v348 = vld [vmem:[%s343 + $0x18] sm:$0xf]
      %v349 = vld [vmem:[%s343 + $0x1c] sm:$0xf]
      %v350 = vld [vmem:[%s343 + $0x24] sm:$0xf]
      %v351 = vld [vmem:[%s343 + $0x28] sm:$0xf]
      %v352 = vld [vmem:[%s343 + $0x30] sm:$0xf]
      %v353 = vld [vmem:[%s343 + $0x34] sm:$0xf]
      %v354 = vld [vmem:[%s343 + $0x3c] sm:$0xf]
      %v355 = vld [vmem:[%s343 + $0x40] sm:$0xf]
      %v356 = vld [vmem:[%s343 + $0x48] sm:$0xf]
      %v357 = vld [vmem:[%s343 + $0x4c] sm:$0xf]
      %v358 = vld [vmem:[%s343 + $0x54] sm:$0xf]
      %v359 = vld [vmem:[%s343 + $0x58] sm:$0xf]
      %v360 = vld [vmem:[%s343 + $0x60] sm:$0xf]
      %v361 = vld [vmem:[%s343 + $0x64] sm:$0xf]
      %v362 = vld [vmem:[%s343 + $0x6c] sm:$0xf]
      %v363 = vld [vmem:[%s343 + $0x70] sm:$0xf]
      %v364 = vld [vmem:[%s343 + $0x78] sm:$0xf]
      %v365 = vld [vmem:[%s343 + $0x7c] sm:$0xf]
      %v366 = vld [vmem:[%s343 + $0x84] sm:$0xf]
      %v367 = vld [vmem:[%s343 + $0x88] sm:$0xf]
      %v368 = vld [vmem:[%s343 + $0x90] sm:$0xf]
      %v369 = vld [vmem:[%s343 + $0x94] sm:$0xf]
      %v370 = vld [vmem:[%s343 + $0x9c] sm:$0xf]
      %v371 = vld [vmem:[%s343 + $0xa0] sm:$0xf]
      %v372 = vld [vmem:[%s343 + $0xa8] sm:$0xf]
      %v373 = vld [vmem:[%s343 + $0xac] sm:$0xf]
      %v374 = vld [vmem:[%s343 + $0xb4] sm:$0xf]
      %v375 = vld [vmem:[%s343 + $0xb8] sm:$0xf]
      %v376 = vld [vmem:[#allocation2] sm:$0xff]
      %v377 = vld [vmem:[#allocation2 + $0x8] sm:$0xff]
      %v378 = vld [vmem:[#allocation2 + $0x10] sm:$0xff]
      %v379 = vld [vmem:[#allocation2 + $0x18] sm:$0xff]
      %v380 = vld [vmem:[#allocation2 + $0x20] sm:$0xff]
      %v381 = vld [vmem:[#allocation2 + $0x28] sm:$0xff]
      %v382 = vld [vmem:[#allocation2 + $0x30] sm:$0xff]
      %v383 = vld [vmem:[#allocation2 + $0x38] sm:$0xff]
      %v384 = vld [vmem:[#allocation2 + $0x40] sm:$0xff]
      %v385 = vld [vmem:[#allocation2 + $0x48] sm:$0xff]
      %v386 = vld [vmem:[#allocation2 + $0x50] sm:$0xff]
      %v387 = vld [vmem:[#allocation2 + $0x58] sm:$0xff]
      %v388 = vld [vmem:[#allocation2 + $0x60] sm:$0xff]
      %v389 = vld [vmem:[#allocation2 + $0x68] sm:$0xff]
      %v390 = vld [vmem:[#allocation2 + $0x70] sm:$0xff]
      %v391 = vld [vmem:[#allocation2 + $0x78] sm:$0xff]
      %v392 = vld [vmem:[#allocation2 + $0x80] sm:$0xff]
      %v393 = vld [vmem:[#allocation2 + $0x88] sm:$0xff]
      %v394 = vld [vmem:[#allocation2 + $0x90] sm:$0xff]
      %v395 = vld [vmem:[#allocation2 + $0x98] sm:$0xff]
      %v396 = vld [vmem:[#allocation2 + $0xa0] sm:$0xff]
      %v397 = vld [vmem:[#allocation2 + $0xa8] sm:$0xff]
      %v398 = vld [vmem:[#allocation2 + $0xb0] sm:$0xff]
      %v399 = vld [vmem:[#allocation2 + $0xb8] sm:$0xff]
      %v400 = vld [vmem:[#allocation2 + $0xc0] sm:$0xff]
      %v401 = vld [vmem:[#allocation2 + $0xc8] sm:$0xff]
      %v402 = vld [vmem:[#allocation2 + $0xd0] sm:$0xff]
      %v403 = vld [vmem:[#allocation2 + $0xd8] sm:$0xff]
      %v404 = vld [vmem:[#allocation2 + $0xe0] sm:$0xff]
      %v405 = vld [vmem:[#allocation2 + $0xe8] sm:$0xff]
      %v406 = vld [vmem:[#allocation2 + $0xf0] sm:$0xff]
      %v407 = vld [vmem:[#allocation2 + $0xf8] sm:$0xff]
      %v408 = vld [vmem:[%s282] sm:$0xf]
      %v409 = vld [vmem:[%s282 + $0x4] sm:$0xf]
      %v410 = vld [vmem:[%s282 + $0x8] sm:$0xf]
      %v411 = vld [vmem:[%s282 + $0xc] sm:$0xf]
      %v412 = vld [vmem:[%s282 + $0x10] sm:$0xf]
      %v413 = vld [vmem:[%s282 + $0x14] sm:$0xf]
      %v414 = vld [vmem:[%s282 + $0x18] sm:$0xf]
      %v415 = vld [vmem:[%s282 + $0x1c] sm:$0xf]
      %v416 = vld [vmem:[%s282 + $0x20] sm:$0xf]
      %v417 = vld [vmem:[%s282 + $0x24] sm:$0xf]
      %v418 = vld [vmem:[%s282 + $0x28] sm:$0xf]
      %v419 = vld [vmem:[%s282 + $0x2c] sm:$0xf]
      %v420 = vld [vmem:[%s282 + $0x30] sm:$0xf]
      %v421 = vld [vmem:[%s282 + $0x34] sm:$0xf]
      %v422 = vld [vmem:[%s282 + $0x38] sm:$0xf]
      %v423 = vld [vmem:[%s282 + $0x3c] sm:$0xf]
      %v456 = vunpack.c.l.b16 %v344
      %v457 = vunpack.c.l.b16 %v345
      %v458 = vunpack.c.l.b16 %v346
      %v459 = vunpack.c.l.b16 %v347
      %v460 = vunpack.c.l.b16 %v348
      %v461 = vunpack.c.l.b16 %v349
      %v462 = vunpack.c.l.b16 %v350
      %v463 = vunpack.c.l.b16 %v351
      %v464 = vunpack.c.l.b16 %v352
      %v465 = vunpack.c.l.b16 %v353
      %v466 = vunpack.c.l.b16 %v354
      %v467 = vunpack.c.l.b16 %v355
      %v468 = vunpack.c.l.b16 %v356
      %v469 = vunpack.c.l.b16 %v357
      %v470 = vunpack.c.l.b16 %v358
      %v471 = vunpack.c.l.b16 %v359
      %v472 = vunpack.c.l.b16 %v360
      %v473 = vunpack.c.l.b16 %v361
      %v474 = vunpack.c.l.b16 %v362
      %v475 = vunpack.c.l.b16 %v363
      %v476 = vunpack.c.l.b16 %v364
      %v477 = vunpack.c.l.b16 %v365
      %v478 = vunpack.c.l.b16 %v366
      %v479 = vunpack.c.l.b16 %v367
      %v480 = vunpack.c.l.b16 %v368
      %v481 = vunpack.c.l.b16 %v369
      %v482 = vunpack.c.l.b16 %v370
      %v483 = vunpack.c.l.b16 %v371
      %v484 = vunpack.c.l.b16 %v372
      %v485 = vunpack.c.l.b16 %v373
      %v486 = vunpack.c.l.b16 %v374
      %v487 = vunpack.c.l.b16 %v375
      %v488 = vpack.c.b16 %v457, %v456
      %v489 = vpack.c.b16 %v459, %v458
      %v490 = vpack.c.b16 %v461, %v460
      %v491 = vpack.c.b16 %v463, %v462
      %v492 = vpack.c.b16 %v465, %v464
      %v493 = vpack.c.b16 %v467, %v466
      %v494 = vpack.c.b16 %v469, %v468
      %v495 = vpack.c.b16 %v471, %v470
      %v496 = vpack.c.b16 %v473, %v472
      %v497 = vpack.c.b16 %v475, %v474
      %v498 = vpack.c.b16 %v477, %v476
      %v499 = vpack.c.b16 %v479, %v478
      %v500 = vpack.c.b16 %v481, %v480
      %v501 = vpack.c.b16 %v483, %v482
      %v502 = vpack.c.b16 %v485, %v484
      %v503 = vpack.c.b16 %v487, %v486
      %v536 = vunpack.c.l.b16 %v408
      %v537 = vunpack.c.l.b16 %v409
      %v538 = vunpack.c.l.b16 %v410
      %v539 = vunpack.c.l.b16 %v411
      %v540 = vunpack.c.l.b16 %v412
      %v541 = vunpack.c.l.b16 %v413
      %v542 = vunpack.c.l.b16 %v414
      %v543 = vunpack.c.l.b16 %v415
      %v544 = vunpack.c.l.b16 %v416
      %v545 = vunpack.c.l.b16 %v417
      %v546 = vunpack.c.l.b16 %v418
      %v547 = vunpack.c.l.b16 %v419
      %v548 = vunpack.c.l.b16 %v420
      %v549 = vunpack.c.l.b16 %v421
      %v550 = vunpack.c.l.b16 %v422
      %v551 = vunpack.c.l.b16 %v423
      %v552 = vpack.c.b16 %v537, %v536
      %v553 = vpack.c.b16 %v539, %v538
      %v554 = vpack.c.b16 %v541, %v540
      %v555 = vpack.c.b16 %v543, %v542
      %v556 = vpack.c.b16 %v545, %v544
      %v557 = vpack.c.b16 %v547, %v546
      %v558 = vpack.c.b16 %v549, %v548
      %v559 = vpack.c.b16 %v551, %v550
      %568 = vmatprep.subr.bf16.mxu0 0
      %569 = vmatpush1.bf16.msra.mxu0 %v552
      %570 = vmatprep.subr.bf16.mxu0 0
      %571 = vmatpush1.bf16.msra.mxu0 %v553
      %572 = vmatprep.subr.bf16.mxu0 0
      %573 = vmatpush1.bf16.msra.mxu0 %v554
      %574 = vmatprep.subr.bf16.mxu0 0
      %575 = vmatpush1.bf16.msra.mxu0 %v555
      %576 = vmatprep.subr.bf16.mxu0 0
      %577 = vmatpush1.bf16.msra.mxu0 %v556
      %578 = vmatprep.subr.bf16.mxu0 0
      %579 = vmatpush1.bf16.msra.mxu0 %v557
      %580 = vmatprep.subr.bf16.mxu0 0
      %581 = vmatpush1.bf16.msra.mxu0 %v558
      %582 = vmatprep.subr.bf16.mxu0 0
      %583 = vmatpush1.bf16.msra.mxu0 %v559
      %584 = vmatprep.subr.bf16.mxu0 0
      %585 = vmatpush1.bf16.msra.mxu0 0
      %586 = vmatprep.subr.bf16.mxu0 0
      %587 = vmatpush1.bf16.msra.mxu0 0
      %588 = vmatprep.subr.bf16.mxu0 0
      %589 = vmatpush1.bf16.msra.mxu0 0
      %590 = vmatprep.subr.bf16.mxu0 0
      %591 = vmatpush1.bf16.msra.mxu0 0
      %592 = vmatprep.subr.bf16.mxu0 0
      %593 = vmatpush1.bf16.msra.mxu0 0
      %594 = vmatprep.subr.bf16.mxu0 0
      %595 = vmatpush1.bf16.msra.mxu0 0
      %596 = vmatprep.subr.bf16.mxu0 0
      %597 = vmatpush1.bf16.msra.mxu0 0
      %598 = vmatprep.subr.bf16.mxu0 0
      %599 = vmatpush1.bf16.msra.mxu0 0
      %600 = vmatprep.mubr.bf16.mxu0 0
      %601 = vmatmul.mubr.bf16.gmra.mrb[0].mxu0 %v488
      %v602 = vpop.f32.mrb[0].mxu0
      %v603 = vadd.f32 0.0, %v602
      %v604 = vpop.f32.mrb[0].mxu0
      %v605 = vpop.f32.mrb[0].mxu0
      %v606 = vadd.f32 0.0, %v605
      %v607 = vpop.f32.mrb[0].mxu0
      %608 = vmatprep.mubr.bf16.mxu0 0
      %609 = vmatmul.mubr.bf16.gmra.mrb[0].mxu0 %v489
      %v610 = vpop.f32.mrb[0].mxu0
      %v611 = vadd.f32 0.0, %v610
      %v612 = vpop.f32.mrb[0].mxu0
      %v613 = vpop.f32.mrb[0].mxu0
      %v614 = vadd.f32 0.0, %v613
      %v615 = vpop.f32.mrb[0].mxu0
      %616 = vmatprep.mubr.bf16.mxu0 0
      %617 = vmatmul.mubr.bf16.gmra.mrb[0].mxu0 %v490
      %v618 = vpop.f32.mrb[0].mxu0
      %v619 = vadd.f32 0.0, %v618
      %v620 = vpop.f32.mrb[0].mxu0
      %v621 = vpop.f32.mrb[0].mxu0
      %v622 = vadd.f32 0.0, %v621
      %v623 = vpop.f32.mrb[0].mxu0
      %624 = vmatprep.mubr.bf16.mxu0 0
      %625 = vmatmul.mubr.bf16.gmra.mrb[0].mxu0 %v491
      %v626 = vpop.f32.mrb[0].mxu0
      %v627 = vadd.f32 0.0, %v626
      %v628 = vpop.f32.mrb[0].mxu0
      %v629 = vpop.f32.mrb[0].mxu0
      %v630 = vadd.f32 0.0, %v629
      %v631 = vpop.f32.mrb[0].mxu0
      %632 = vmatprep.mubr.bf16.mxu0 0
      %633 = vmatmul.mubr.bf16.gmra.mrb[0].mxu0 %v492
      %v634 = vpop.f32.mrb[0].mxu0
      %v635 = vadd.f32 0.0, %v634
      %v636 = vpop.f32.mrb[0].mxu0
      %v637 = vpop.f32.mrb[0].mxu0
      %v638 = vadd.f32 0.0, %v637
      %v639 = vpop.f32.mrb[0].mxu0
      %640 = vmatprep.mubr.bf16.mxu0 0
      %641 = vmatmul.mubr.bf16.gmra.mrb[0].mxu0 %v493
      %v642 = vpop.f32.mrb[0].mxu0
      %v643 = vadd.f32 0.0, %v642
      %v644 = vpop.f32.mrb[0].mxu0
      %v645 = vpop.f32.mrb[0].mxu0
      %v646 = vadd.f32 0.0, %v645
      %v647 = vpop.f32.mrb[0].mxu0
      %648 = vmatprep.mubr.bf16.mxu0 0
      %649 = vmatmul.mubr.bf16.gmra.mrb[0].mxu0 %v494
      %v650 = vpop.f32.mrb[0].mxu0
      %v651 = vadd.f32 0.0, %v650
      %v652 = vpop.f32.mrb[0].mxu0
      %v653 = vpop.f32.mrb[0].mxu0
      %v654 = vadd.f32 0.0, %v653
      %v655 = vpop.f32.mrb[0].mxu0
      %656 = vmatprep.mubr.bf16.mxu0 0
      %657 = vmatmul.mubr.bf16.gmra.mrb[0].mxu0 %v495
      %v658 = vpop.f32.mrb[0].mxu0
      %v659 = vadd.f32 0.0, %v658
      %v660 = vpop.f32.mrb[0].mxu0
      %v661 = vpop.f32.mrb[0].mxu0
      %v662 = vadd.f32 0.0, %v661
      %v663 = vpop.f32.mrb[0].mxu0
      %664 = vmatprep.mubr.bf16.mxu0 0
      %665 = vmatmul.mubr.bf16.gmra.mrb[0].mxu0 %v496
      %v666 = vpop.f32.mrb[0].mxu0
      %v667 = vadd.f32 0.0, %v666
      %v668 = vpop.f32.mrb[0].mxu0
      %v669 = vpop.f32.mrb[0].mxu0
      %v670 = vadd.f32 0.0, %v669
      %v671 = vpop.f32.mrb[0].mxu0
      %672 = vmatprep.mubr.bf16.mxu0 0
      %673 = vmatmul.mubr.bf16.gmra.mrb[0].mxu0 %v497
      %v674 = vpop.f32.mrb[0].mxu0
      %v675 = vadd.f32 0.0, %v674
      %v676 = vpop.f32.mrb[0].mxu0
      %v677 = vpop.f32.mrb[0].mxu0
      %v678 = vadd.f32 0.0, %v677
      %v679 = vpop.f32.mrb[0].mxu0
      %680 = vmatprep.mubr.bf16.mxu0 0
      %681 = vmatmul.mubr.bf16.gmra.mrb[0].mxu0 %v498
      %v682 = vpop.f32.mrb[0].mxu0
      %v683 = vadd.f32 0.0, %v682
      %v684 = vpop.f32.mrb[0].mxu0
      %v685 = vpop.f32.mrb[0].mxu0
      %v686 = vadd.f32 0.0, %v685
      %v687 = vpop.f32.mrb[0].mxu0
      %688 = vmatprep.mubr.bf16.mxu0 0
      %689 = vmatmul.mubr.bf16.gmra.mrb[0].mxu0 %v499
      %v690 = vpop.f32.mrb[0].mxu0
      %v691 = vadd.f32 0.0, %v690
      %v692 = vpop.f32.mrb[0].mxu0
      %v693 = vpop.f32.mrb[0].mxu0
      %v694 = vadd.f32 0.0, %v693
      %v695 = vpop.f32.mrb[0].mxu0
      %696 = vmatprep.mubr.bf16.mxu0 0
      %697 = vmatmul.mubr.bf16.gmra.mrb[0].mxu0 %v500
      %v698 = vpop.f32.mrb[0].mxu0
      %v699 = vadd.f32 0.0, %v698
      %v700 = vpop.f32.mrb[0].mxu0
      %v701 = vpop.f32.mrb[0].mxu0
      %v702 = vadd.f32 0.0, %v701
      %v703 = vpop.f32.mrb[0].mxu0
      %704 = vmatprep.mubr.bf16.mxu0 0
      %705 = vmatmul.mubr.bf16.gmra.mrb[0].mxu0 %v501
      %v706 = vpop.f32.mrb[0].mxu0
      %v707 = vadd.f32 0.0, %v706
      %v708 = vpop.f32.mrb[0].mxu0
      %v709 = vpop.f32.mrb[0].mxu0
      %v710 = vadd.f32 0.0, %v709
      %v711 = vpop.f32.mrb[0].mxu0
      %712 = vmatprep.mubr.bf16.mxu0 0
      %713 = vmatmul.mubr.bf16.gmra.mrb[0].mxu0 %v502
      %v714 = vpop.f32.mrb[0].mxu0
      %v715 = vadd.f32 0.0, %v714
      %v716 = vpop.f32.mrb[0].mxu0
      %v717 = vpop.f32.mrb[0].mxu0
      %v718 = vadd.f32 0.0, %v717
      %v719 = vpop.f32.mrb[0].mxu0
      %720 = vmatprep.mubr.bf16.mxu0 0
      %721 = vmatmul.mubr.bf16.gmra.mrb[0].mxu0 %v503
      %v722 = vpop.f32.mrb[0].mxu0
      %v723 = vadd.f32 0.0, %v722
      %v724 = vpop.f32.mrb[0].mxu0
      %v725 = vpop.f32.mrb[0].mxu0
      %v726 = vadd.f32 0.0, %v725
      %v727 = vpop.f32.mrb[0].mxu0
      %728 = vdwg.mxu0
      %v729 = vadd.f32 %v376, %v603
      %v730 = vadd.f32 %v377, %v606
      %v731 = vadd.f32 %v378, %v611
      %v732 = vadd.f32 %v379, %v614
      %v733 = vadd.f32 %v380, %v619
      %v734 = vadd.f32 %v381, %v622
      %v735 = vadd.f32 %v382, %v627
      %v736 = vadd.f32 %v383, %v630
      %v737 = vadd.f32 %v384, %v635
      %v738 = vadd.f32 %v385, %v638
      %v739 = vadd.f32 %v386, %v643
      %v740 = vadd.f32 %v387, %v646
      %v741 = vadd.f32 %v388, %v651
      %v742 = vadd.f32 %v389, %v654
      %v743 = vadd.f32 %v390, %v659
      %v744 = vadd.f32 %v391, %v662
      %v745 = vadd.f32 %v392, %v667
      %v746 = vadd.f32 %v393, %v670
      %v747 = vadd.f32 %v394, %v675
      %v748 = vadd.f32 %v395, %v678
      %v749 = vadd.f32 %v396, %v683
      %v750 = vadd.f32 %v397, %v686
      %v751 = vadd.f32 %v398, %v691
      %v752 = vadd.f32 %v399, %v694
      %v753 = vadd.f32 %v400, %v699
      %v754 = vadd.f32 %v401, %v702
      %v755 = vadd.f32 %v402, %v707
      %v756 = vadd.f32 %v403, %v710
      %v757 = vadd.f32 %v404, %v715
      %v758 = vadd.f32 %v405, %v718
      %v759 = vadd.f32 %v406, %v723
      %v760 = vadd.f32 %v407, %v726
      %761 = vst [vmem:[#allocation2] sm:$0xff] %v729
      %762 = vst [vmem:[#allocation2 + $0x8] sm:$0xff] %v730
      %763 = vst [vmem:[#allocation2 + $0x10] sm:$0xff] %v731
      %764 = vst [vmem:[#allocation2 + $0x18] sm:$0xff] %v732
      %765 = vst [vmem:[#allocation2 + $0x20] sm:$0xff] %v733
      %766 = vst [vmem:[#allocation2 + $0x28] sm:$0xff] %v734
      %767 = vst [vmem:[#allocation2 + $0x30] sm:$0xff] %v735
      %768 = vst [vmem:[#allocation2 + $0x38] sm:$0xff] %v736
      %769 = vst [vmem:[#allocation2 + $0x40] sm:$0xff] %v737
      %770 = vst [vmem:[#allocation2 + $0x48] sm:$0xff] %v738
      %771 = vst [vmem:[#allocation2 + $0x50] sm:$0xff] %v739
      %772 = vst [vmem:[#allocation2 + $0x58] sm:$0xff] %v740
      %773 = vst [vmem:[#allocation2 + $0x60] sm:$0xff] %v741
      %774 = vst [vmem:[#allocation2 + $0x68] sm:$0xff] %v742
      %775 = vst [vmem:[#allocation2 + $0x70] sm:$0xff] %v743
      %776 = vst [vmem:[#allocation2 + $0x78] sm:$0xff] %v744
      %777 = vst [vmem:[#allocation2 + $0x80] sm:$0xff] %v745
      %778 = vst [vmem:[#allocation2 + $0x88] sm:$0xff] %v746
      %779 = vst [vmem:[#allocation2 + $0x90] sm:$0xff] %v747
      %780 = vst [vmem:[#allocation2 + $0x98] sm:$0xff] %v748
      %781 = vst [vmem:[#allocation2 + $0xa0] sm:$0xff] %v749
      %782 = vst [vmem:[#allocation2 + $0xa8] sm:$0xff] %v750
      %783 = vst [vmem:[#allocation2 + $0xb0] sm:$0xff] %v751
      %784 = vst [vmem:[#allocation2 + $0xb8] sm:$0xff] %v752
      %785 = vst [vmem:[#allocation2 + $0xc0] sm:$0xff] %v753
      %786 = vst [vmem:[#allocation2 + $0xc8] sm:$0xff] %v754
      %787 = vst [vmem:[#allocation2 + $0xd0] sm:$0xff] %v755
      %788 = vst [vmem:[#allocation2 + $0xd8] sm:$0xff] %v756
      %789 = vst [vmem:[#allocation2 + $0xe0] sm:$0xff] %v757
      %790 = vst [vmem:[#allocation2 + $0xe8] sm:$0xff] %v758
      %791 = vst [vmem:[#allocation2 + $0xf0] sm:$0xff] %v759
      %792 = vst [vmem:[#allocation2 + $0xf8] sm:$0xff] %v760
      %v793 = vld [vmem:[%s343] sm:$0xf]
      %v794 = vld [vmem:[%s343 + $0x4] sm:$0xf]
      %v795 = vld [vmem:[%s343 + $0x8] sm:$0x1]
      %v796 = vld [vmem:[%s343 + $0xc] sm:$0xf]
      %v797 = vld [vmem:[%s343 + $0x10] sm:$0xf]
      %v798 = vld [vmem:[%s343 + $0x14] sm:$0x1]
      %v799 = vld [vmem:[%s343 + $0x18] sm:$0xf]
      %v800 = vld [vmem:[%s343 + $0x1c] sm:$0xf]
      %v801 = vld [vmem:[%s343 + $0x20] sm:$0x1]
      %v802 = vld [vmem:[%s343 + $0x24] sm:$0xf]
      %v803 = vld [vmem:[%s343 + $0x28] sm:$0xf]
      %v804 = vld [vmem:[%s343 + $0x2c] sm:$0x1]
      %v805 = vld [vmem:[%s343 + $0x30] sm:$0xf]
      %v806 = vld [vmem:[%s343 + $0x34] sm:$0xf]
      %v807 = vld [vmem:[%s343 + $0x38] sm:$0x1]
      %v808 = vld [vmem:[%s343 + $0x3c] sm:$0xf]
      %v809 = vld [vmem:[%s343 + $0x40] sm:$0xf]
      %v810 = vld [vmem:[%s343 + $0x44] sm:$0x1]
      %v811 = vld [vmem:[%s343 + $0x48] sm:$0xf]
      %v812 = vld [vmem:[%s343 + $0x4c] sm:$0xf]
      %v813 = vld [vmem:[%s343 + $0x50] sm:$0x1]
      %v814 = vld [vmem:[%s343 + $0x54] sm:$0xf]
      %v815 = vld [vmem:[%s343 + $0x58] sm:$0xf]
      %v816 = vld [vmem:[%s343 + $0x5c] sm:$0x1]
      %v817 = vld [vmem:[%s343 + $0x60] sm:$0xf]
      %v818 = vld [vmem:[%s343 + $0x64] sm:$0xf]
      %v819 = vld [vmem:[%s343 + $0x68] sm:$0x1]
      %v820 = vld [vmem:[%s343 + $0x6c] sm:$0xf]
      %v821 = vld [vmem:[%s343 + $0x70] sm:$0xf]
      %v822 = vld [vmem:[%s343 + $0x74] sm:$0x1]
      %v823 = vld [vmem:[%s343 + $0x78] sm:$0xf]
      %v824 = vld [vmem:[%s343 + $0x7c] sm:$0xf]
      %v825 = vld [vmem:[%s343 + $0x80] sm:$0x1]
      %v826 = vld [vmem:[%s343 + $0x84] sm:$0xf]
      %v827 = vld [vmem:[%s343 + $0x88] sm:$0xf]
      %v828 = vld [vmem:[%s343 + $0x8c] sm:$0x1]
      %v829 = vld [vmem:[%s343 + $0x90] sm:$0xf]
      %v830 = vld [vmem:[%s343 + $0x94] sm:$0xf]
      %v831 = vld [vmem:[%s343 + $0x98] sm:$0x1]
      %v832 = vld [vmem:[%s343 + $0x9c] sm:$0xf]
      %v833 = vld [vmem:[%s343 + $0xa0] sm:$0xf]
      %v834 = vld [vmem:[%s343 + $0xa4] sm:$0x1]
      %v835 = vld [vmem:[%s343 + $0xa8] sm:$0xf]
      %v836 = vld [vmem:[%s343 + $0xac] sm:$0xf]
      %v837 = vld [vmem:[%s343 + $0xb0] sm:$0x1]
      %v838 = vld [vmem:[%s343 + $0xb4] sm:$0xf]
      %v839 = vld [vmem:[%s343 + $0xb8] sm:$0xf]
      %v840 = vld [vmem:[%s343 + $0xbc] sm:$0x1]
      %vm841 = vsmask.f32 3328
      %vm842 = vsmask.f32 7440
      %vm843 = vmor %vm841, %vm842
      %v845 = vshrl.u32 %v793, 16
      %v847 = vrot.slane %v845, 4
      %v848 = vshll.u32 %v793, 16
      %v850 = vrot.slane %v848, 5
      %v851 = vor.u32 %v847, %v850
      %v852 = vrot.slane %v851, 4
      %v854 = vshll.u32 %v794, 16
      %v856 = vrot.slane %v854, 5
      %v857 = vsel %vm843, %v852, %v856
      %v858 = vshrl.u32 %v794, 16
      %v860 = vrot.slane %v858, 4
      %v861 = vor.u32 %v860, %v856
      %v862 = vrot.slane %v861, 4
      %v864 = vshll.u32 %v795, 16
      %v866 = vrot.slane %v864, 5
      %v867 = vsel %vm843, %v862, %v866
      %v869 = vshrl.u32 %v796, 16
      %v871 = vrot.slane %v869, 4
      %v872 = vshll.u32 %v796, 16
      %v874 = vrot.slane %v872, 5
      %v875 = vor.u32 %v871, %v874
      %v876 = vrot.slane %v875, 4
      %v878 = vshll.u32 %v797, 16
      %v880 = vrot.slane %v878, 5
      %v881 = vsel %vm843, %v876, %v880
      %v882 = vshrl.u32 %v797, 16
      %v884 = vrot.slane %v882, 4
      %v885 = vor.u32 %v884, %v880
      %v886 = vrot.slane %v885, 4
      %v888 = vshll.u32 %v798, 16
      %v890 = vrot.slane %v888, 5
      %v891 = vsel %vm843, %v886, %v890
      %v893 = vshrl.u32 %v799, 16
      %v895 = vrot.slane %v893, 4
      %v896 = vshll.u32 %v799, 16
      %v898 = vrot.slane %v896, 5
      %v899 = vor.u32 %v895, %v898
      %v900 = vrot.slane %v899, 4
      %v902 = vshll.u32 %v800, 16
      %v904 = vrot.slane %v902, 5
      %v905 = vsel %vm843, %v900, %v904
      %v906 = vshrl.u32 %v800, 16
      %v908 = vrot.slane %v906, 4
      %v909 = vor.u32 %v908, %v904
      %v910 = vrot.slane %v909, 4
      %v912 = vshll.u32 %v801, 16
      %v914 = vrot.slane %v912, 5
      %v915 = vsel %vm843, %v910, %v914
      %v917 = vshrl.u32 %v802, 16
      %v919 = vrot.slane %v917, 4
      %v920 = vshll.u32 %v802, 16
      %v922 = vrot.slane %v920, 5
      %v923 = vor.u32 %v919, %v922
      %v924 = vrot.slane %v923, 4
      %v926 = vshll.u32 %v803, 16
      %v928 = vrot.slane %v926, 5
      %v929 = vsel %vm843, %v924, %v928
      %v930 = vshrl.u32 %v803, 16
      %v932 = vrot.slane %v930, 4
      %v933 = vor.u32 %v932, %v928
      %v934 = vrot.slane %v933, 4
      %v936 = vshll.u32 %v804, 16
      %v938 = vrot.slane %v936, 5
      %v939 = vsel %vm843, %v934, %v938
      %v941 = vshrl.u32 %v805, 16
      %v943 = vrot.slane %v941, 4
      %v944 = vshll.u32 %v805, 16
      %v946 = vrot.slane %v944, 5
      %v947 = vor.u32 %v943, %v946
      %v948 = vrot.slane %v947, 4
      %v950 = vshll.u32 %v806, 16
      %v952 = vrot.slane %v950, 5
      %v953 = vsel %vm843, %v948, %v952
      %v954 = vshrl.u32 %v806, 16
      %v956 = vrot.slane %v954, 4
      %v957 = vor.u32 %v956, %v952
      %v958 = vrot.slane %v957, 4
      %v960 = vshll.u32 %v807, 16
      %v962 = vrot.slane %v960, 5
      %v963 = vsel %vm843, %v958, %v962
      %v965 = vshrl.u32 %v808, 16
      %v967 = vrot.slane %v965, 4
      %v968 = vshll.u32 %v808, 16
      %v970 = vrot.slane %v968, 5
      %v971 = vor.u32 %v967, %v970
      %v972 = vrot.slane %v971, 4
      %v974 = vshll.u32 %v809, 16
      %v976 = vrot.slane %v974, 5
      %v977 = vsel %vm843, %v972, %v976
      %v978 = vshrl.u32 %v809, 16
      %v980 = vrot.slane %v978, 4
      %v981 = vor.u32 %v980, %v976
      %v982 = vrot.slane %v981, 4
      %v984 = vshll.u32 %v810, 16
      %v986 = vrot.slane %v984, 5
      %v987 = vsel %vm843, %v982, %v986
      %v989 = vshrl.u32 %v811, 16
      %v991 = vrot.slane %v989, 4
      %v992 = vshll.u32 %v811, 16
      %v994 = vrot.slane %v992, 5
      %v995 = vor.u32 %v991, %v994
      %v996 = vrot.slane %v995, 4
      %v998 = vshll.u32 %v812, 16
      %v1000 = vrot.slane %v998, 5
      %v1001 = vsel %vm843, %v996, %v1000
      %v1002 = vshrl.u32 %v812, 16
      %v1004 = vrot.slane %v1002, 4
      %v1005 = vor.u32 %v1004, %v1000
      %v1006 = vrot.slane %v1005, 4
      %v1008 = vshll.u32 %v813, 16
      %v1010 = vrot.slane %v1008, 5
      %v1011 = vsel %vm843, %v1006, %v1010
      %v1013 = vshrl.u32 %v814, 16
      %v1015 = vrot.slane %v1013, 4
      %v1016 = vshll.u32 %v814, 16
      %v1018 = vrot.slane %v1016, 5
      %v1019 = vor.u32 %v1015, %v1018
      %v1020 = vrot.slane %v1019, 4
      %v1022 = vshll.u32 %v815, 16
      %v1024 = vrot.slane %v1022, 5
      %v1025 = vsel %vm843, %v1020, %v1024
      %v1026 = vshrl.u32 %v815, 16
      %v1028 = vrot.slane %v1026, 4
      %v1029 = vor.u32 %v1028, %v1024
      %v1030 = vrot.slane %v1029, 4
      %v1032 = vshll.u32 %v816, 16
      %v1034 = vrot.slane %v1032, 5
      %v1035 = vsel %vm843, %v1030, %v1034
      %v1037 = vshrl.u32 %v817, 16
      %v1039 = vrot.slane %v1037, 4
      %v1040 = vshll.u32 %v817, 16
      %v1042 = vrot.slane %v1040, 5
      %v1043 = vor.u32 %v1039, %v1042
      %v1044 = vrot.slane %v1043, 4
      %v1046 = vshll.u32 %v818, 16
      %v1048 = vrot.slane %v1046, 5
      %v1049 = vsel %vm843, %v1044, %v1048
      %v1050 = vshrl.u32 %v818, 16
      %v1052 = vrot.slane %v1050, 4
      %v1053 = vor.u32 %v1052, %v1048
      %v1054 = vrot.slane %v1053, 4
      %v1056 = vshll.u32 %v819, 16
      %v1058 = vrot.slane %v1056, 5
      %v1059 = vsel %vm843, %v1054, %v1058
      %v1061 = vshrl.u32 %v820, 16
      %v1063 = vrot.slane %v1061, 4
      %v1064 = vshll.u32 %v820, 16
      %v1066 = vrot.slane %v1064, 5
      %v1067 = vor.u32 %v1063, %v1066
      %v1068 = vrot.slane %v1067, 4
      %v1070 = vshll.u32 %v821, 16
      %v1072 = vrot.slane %v1070, 5
      %v1073 = vsel %vm843, %v1068, %v1072
      %v1074 = vshrl.u32 %v821, 16
      %v1076 = vrot.slane %v1074, 4
      %v1077 = vor.u32 %v1076, %v1072
      %v1078 = vrot.slane %v1077, 4
      %v1080 = vshll.u32 %v822, 16
      %v1082 = vrot.slane %v1080, 5
      %v1083 = vsel %vm843, %v1078, %v1082
      %v1085 = vshrl.u32 %v823, 16
      %v1087 = vrot.slane %v1085, 4
      %v1088 = vshll.u32 %v823, 16
      %v1090 = vrot.slane %v1088, 5
      %v1091 = vor.u32 %v1087, %v1090
      %v1092 = vrot.slane %v1091, 4
      %v1094 = vshll.u32 %v824, 16
      %v1096 = vrot.slane %v1094, 5
      %v1097 = vsel %vm843, %v1092, %v1096
      %v1098 = vshrl.u32 %v824, 16
      %v1100 = vrot.slane %v1098, 4
      %v1101 = vor.u32 %v1100, %v1096
      %v1102 = vrot.slane %v1101, 4
      %v1104 = vshll.u32 %v825, 16
      %v1106 = vrot.slane %v1104, 5
      %v1107 = vsel %vm843, %v1102, %v1106
      %v1109 = vshrl.u32 %v826, 16
      %v1111 = vrot.slane %v1109, 4
      %v1112 = vshll.u32 %v826, 16
      %v1114 = vrot.slane %v1112, 5
      %v1115 = vor.u32 %v1111, %v1114
      %v1116 = vrot.slane %v1115, 4
      %v1118 = vshll.u32 %v827, 16
      %v1120 = vrot.slane %v1118, 5
      %v1121 = vsel %vm843, %v1116, %v1120
      %v1122 = vshrl.u32 %v827, 16
      %v1124 = vrot.slane %v1122, 4
      %v1125 = vor.u32 %v1124, %v1120
      %v1126 = vrot.slane %v1125, 4
      %v1128 = vshll.u32 %v828, 16
      %v1130 = vrot.slane %v1128, 5
      %v1131 = vsel %vm843, %v1126, %v1130
      %v1133 = vshrl.u32 %v829, 16
      %v1135 = vrot.slane %v1133, 4
      %v1136 = vshll.u32 %v829, 16
      %v1138 = vrot.slane %v1136, 5
      %v1139 = vor.u32 %v1135, %v1138
      %v1140 = vrot.slane %v1139, 4
      %v1142 = vshll.u32 %v830, 16
      %v1144 = vrot.slane %v1142, 5
      %v1145 = vsel %vm843, %v1140, %v1144
      %v1146 = vshrl.u32 %v830, 16
      %v1148 = vrot.slane %v1146, 4
      %v1149 = vor.u32 %v1148, %v1144
      %v1150 = vrot.slane %v1149, 4
      %v1152 = vshll.u32 %v831, 16
      %v1154 = vrot.slane %v1152, 5
      %v1155 = vsel %vm843, %v1150, %v1154
      %v1157 = vshrl.u32 %v832, 16
      %v1159 = vrot.slane %v1157, 4
      %v1160 = vshll.u32 %v832, 16
      %v1162 = vrot.slane %v1160, 5
      %v1163 = vor.u32 %v1159, %v1162
      %v1164 = vrot.slane %v1163, 4
      %v1166 = vshll.u32 %v833, 16
      %v1168 = vrot.slane %v1166, 5
      %v1169 = vsel %vm843, %v1164, %v1168
      %v1170 = vshrl.u32 %v833, 16
      %v1172 = vrot.slane %v1170, 4
      %v1173 = vor.u32 %v1172, %v1168
      %v1174 = vrot.slane %v1173, 4
      %v1176 = vshll.u32 %v834, 16
      %v1178 = vrot.slane %v1176, 5
      %v1179 = vsel %vm843, %v1174, %v1178
      %v1181 = vshrl.u32 %v835, 16
      %v1183 = vrot.slane %v1181, 4
      %v1184 = vshll.u32 %v835, 16
      %v1186 = vrot.slane %v1184, 5
      %v1187 = vor.u32 %v1183, %v1186
      %v1188 = vrot.slane %v1187, 4
      %v1190 = vshll.u32 %v836, 16
      %v1192 = vrot.slane %v1190, 5
      %v1193 = vsel %vm843, %v1188, %v1192
      %v1194 = vshrl.u32 %v836, 16
      %v1196 = vrot.slane %v1194, 4
      %v1197 = vor.u32 %v1196, %v1192
      %v1198 = vrot.slane %v1197, 4
      %v1200 = vshll.u32 %v837, 16
      %v1202 = vrot.slane %v1200, 5
      %v1203 = vsel %vm843, %v1198, %v1202
      %v1205 = vshrl.u32 %v838, 16
      %v1207 = vrot.slane %v1205, 4
      %v1208 = vshll.u32 %v838, 16
      %v1210 = vrot.slane %v1208, 5
      %v1211 = vor.u32 %v1207, %v1210
      %v1212 = vrot.slane %v1211, 4
      %v1214 = vshll.u32 %v839, 16
      %v1216 = vrot.slane %v1214, 5
      %v1217 = vsel %vm843, %v1212, %v1216
      %v1218 = vshrl.u32 %v839, 16
      %v1220 = vrot.slane %v1218, 4
      %v1221 = vor.u32 %v1220, %v1216
      %v1222 = vrot.slane %v1221, 4
      %v1224 = vshll.u32 %v840, 16
      %v1226 = vrot.slane %v1224, 5
      %v1227 = vsel %vm843, %v1222, %v1226
      %v1228 = vld [vmem:[#allocation2] sm:$0xff]
      %v1229 = vld [vmem:[#allocation2 + $0x8] sm:$0xff]
      %v1230 = vld [vmem:[#allocation2 + $0x10] sm:$0xff]
      %v1231 = vld [vmem:[#allocation2 + $0x18] sm:$0xff]
      %v1232 = vld [vmem:[#allocation2 + $0x20] sm:$0xff]
      %v1233 = vld [vmem:[#allocation2 + $0x28] sm:$0xff]
      %v1234 = vld [vmem:[#allocation2 + $0x30] sm:$0xff]
      %v1235 = vld [vmem:[#allocation2 + $0x38] sm:$0xff]
      %v1236 = vld [vmem:[#allocation2 + $0x40] sm:$0xff]
      %v1237 = vld [vmem:[#allocation2 + $0x48] sm:$0xff]
      %v1238 = vld [vmem:[#allocation2 + $0x50] sm:$0xff]
      %v1239 = vld [vmem:[#allocation2 + $0x58] sm:$0xff]
      %v1240 = vld [vmem:[#allocation2 + $0x60] sm:$0xff]
      %v1241 = vld [vmem:[#allocation2 + $0x68] sm:$0xff]
      %v1242 = vld [vmem:[#allocation2 + $0x70] sm:$0xff]
      %v1243 = vld [vmem:[#allocation2 + $0x78] sm:$0xff]
      %v1244 = vld [vmem:[#allocation2 + $0x80] sm:$0xff]
      %v1245 = vld [vmem:[#allocation2 + $0x88] sm:$0xff]
      %v1246 = vld [vmem:[#allocation2 + $0x90] sm:$0xff]
      %v1247 = vld [vmem:[#allocation2 + $0x98] sm:$0xff]
      %v1248 = vld [vmem:[#allocation2 + $0xa0] sm:$0xff]
      %v1249 = vld [vmem:[#allocation2 + $0xa8] sm:$0xff]
      %v1250 = vld [vmem:[#allocation2 + $0xb0] sm:$0xff]
      %v1251 = vld [vmem:[#allocation2 + $0xb8] sm:$0xff]
      %v1252 = vld [vmem:[#allocation2 + $0xc0] sm:$0xff]
      %v1253 = vld [vmem:[#allocation2 + $0xc8] sm:$0xff]
      %v1254 = vld [vmem:[#allocation2 + $0xd0] sm:$0xff]
      %v1255 = vld [vmem:[#allocation2 + $0xd8] sm:$0xff]
      %v1256 = vld [vmem:[#allocation2 + $0xe0] sm:$0xff]
      %v1257 = vld [vmem:[#allocation2 + $0xe8] sm:$0xff]
      %v1258 = vld [vmem:[#allocation2 + $0xf0] sm:$0xff]
      %v1259 = vld [vmem:[#allocation2 + $0xf8] sm:$0xff]
      %s1260 = scalar_lea.vmem %s282, 64
      %v1261 = vld [vmem:[%s1260] sm:$0xf]
      %v1262 = vld [vmem:[%s1260 + $0x4] sm:$0xf]
      %v1263 = vld [vmem:[%s1260 + $0x8] sm:$0xf]
      %v1264 = vld [vmem:[%s1260 + $0xc] sm:$0xf]
      %v1265 = vld [vmem:[%s1260 + $0x10] sm:$0xf]
      %v1266 = vld [vmem:[%s1260 + $0x14] sm:$0xf]
      %v1267 = vld [vmem:[%s1260 + $0x18] sm:$0xf]
      %v1268 = vld [vmem:[%s1260 + $0x1c] sm:$0xf]
      %v1269 = vld [vmem:[%s1260 + $0x20] sm:$0xf]
      %v1270 = vld [vmem:[%s1260 + $0x24] sm:$0xf]
      %v1271 = vld [vmem:[%s1260 + $0x28] sm:$0xf]
      %v1272 = vld [vmem:[%s1260 + $0x2c] sm:$0xf]
      %v1273 = vld [vmem:[%s1260 + $0x30] sm:$0xf]
      %v1274 = vld [vmem:[%s1260 + $0x34] sm:$0xf]
      %v1275 = vld [vmem:[%s1260 + $0x38] sm:$0xf]
      %v1276 = vld [vmem:[%s1260 + $0x3c] sm:$0xf]
      %v1277 = vunpack.c.l.b16 %v857
      %v1278 = vunpack.c.l.b16 %v867
      %v1279 = vunpack.c.l.b16 %v881
      %v1280 = vunpack.c.l.b16 %v891
      %v1281 = vunpack.c.l.b16 %v905
      %v1282 = vunpack.c.l.b16 %v915
      %v1283 = vunpack.c.l.b16 %v929
      %v1284 = vunpack.c.l.b16 %v939
      %v1285 = vunpack.c.l.b16 %v953
      %v1286 = vunpack.c.l.b16 %v963
      %v1287 = vunpack.c.l.b16 %v977
      %v1288 = vunpack.c.l.b16 %v987
      %v1289 = vunpack.c.l.b16 %v1001
      %v1290 = vunpack.c.l.b16 %v1011
      %v1291 = vunpack.c.l.b16 %v1025
      %v1292 = vunpack.c.l.b16 %v1035
      %v1293 = vunpack.c.l.b16 %v1049
      %v1294 = vunpack.c.l.b16 %v1059
      %v1295 = vunpack.c.l.b16 %v1073
      %v1296 = vunpack.c.l.b16 %v1083
      %v1297 = vunpack.c.l.b16 %v1097
      %v1298 = vunpack.c.l.b16 %v1107
      %v1299 = vunpack.c.l.b16 %v1121
      %v1300 = vunpack.c.l.b16 %v1131
      %v1301 = vunpack.c.l.b16 %v1145
      %v1302 = vunpack.c.l.b16 %v1155
      %v1303 = vunpack.c.l.b16 %v1169
      %v1304 = vunpack.c.l.b16 %v1179
      %v1305 = vunpack.c.l.b16 %v1193
      %v1306 = vunpack.c.l.b16 %v1203
      %v1307 = vunpack.c.l.b16 %v1217
      %v1308 = vunpack.c.l.b16 %v1227
      %v1309 = vpack.c.b16 %v1278, %v1277
      %v1310 = vpack.c.b16 %v1280, %v1279
      %v1311 = vpack.c.b16 %v1282, %v1281
      %v1312 = vpack.c.b16 %v1284, %v1283
      %v1313 = vpack.c.b16 %v1286, %v1285
      %v1314 = vpack.c.b16 %v1288, %v1287
      %v1315 = vpack.c.b16 %v1290, %v1289
      %v1316 = vpack.c.b16 %v1292, %v1291
      %v1317 = vpack.c.b16 %v1294, %v1293
      %v1318 = vpack.c.b16 %v1296, %v1295
      %v1319 = vpack.c.b16 %v1298, %v1297
      %v1320 = vpack.c.b16 %v1300, %v1299
      %v1321 = vpack.c.b16 %v1302, %v1301
      %v1322 = vpack.c.b16 %v1304, %v1303
      %v1323 = vpack.c.b16 %v1306, %v1305
      %v1324 = vpack.c.b16 %v1308, %v1307
      %v1357 = vunpack.c.l.b16 %v1261
      %v1358 = vunpack.c.l.b16 %v1262
      %v1359 = vunpack.c.l.b16 %v1263
      %v1360 = vunpack.c.l.b16 %v1264
      %v1361 = vunpack.c.l.b16 %v1265
      %v1362 = vunpack.c.l.b16 %v1266
      %v1363 = vunpack.c.l.b16 %v1267
      %v1364 = vunpack.c.l.b16 %v1268
      %v1365 = vunpack.c.l.b16 %v1269
      %v1366 = vunpack.c.l.b16 %v1270
      %v1367 = vunpack.c.l.b16 %v1271
      %v1368 = vunpack.c.l.b16 %v1272
      %v1369 = vunpack.c.l.b16 %v1273
      %v1370 = vunpack.c.l.b16 %v1274
      %v1371 = vunpack.c.l.b16 %v1275
      %v1372 = vunpack.c.l.b16 %v1276
      %v1373 = vpack.c.b16 %v1358, %v1357
      %v1374 = vpack.c.b16 %v1360, %v1359
      %v1375 = vpack.c.b16 %v1362, %v1361
      %v1376 = vpack.c.b16 %v1364, %v1363
      %v1377 = vpack.c.b16 %v1366, %v1365
      %v1378 = vpack.c.b16 %v1368, %v1367
      %v1379 = vpack.c.b16 %v1370, %v1369
      %v1380 = vpack.c.b16 %v1372, %v1371
      %1389 = vmatprep.subr.bf16.mxu0 0
      %1390 = vmatpush1.bf16.msra.mxu0 %v1373
      %1391 = vmatprep.subr.bf16.mxu0 0
      %1392 = vmatpush1.bf16.msra.mxu0 %v1374
      %1393 = vmatprep.subr.bf16.mxu0 0
      %1394 = vmatpush1.bf16.msra.mxu0 %v1375
      %1395 = vmatprep.subr.bf16.mxu0 0
      %1396 = vmatpush1.bf16.msra.mxu0 %v1376
      %1397 = vmatprep.subr.bf16.mxu0 0
      %1398 = vmatpush1.bf16.msra.mxu0 %v1377
      %1399 = vmatprep.subr.bf16.mxu0 0
      %1400 = vmatpush1.bf16.msra.mxu0 %v1378
      %1401 = vmatprep.subr.bf16.mxu0 0
      %1402 = vmatpush1.bf16.msra.mxu0 %v1379
      %1403 = vmatprep.subr.bf16.mxu0 0
      %1404 = vmatpush1.bf16.msra.mxu0 %v1380
      %1405 = vmatprep.subr.bf16.mxu0 0
      %1406 = vmatpush1.bf16.msra.mxu0 0
      %1407 = vmatprep.subr.bf16.mxu0 0
      %1408 = vmatpush1.bf16.msra.mxu0 0
      %1409 = vmatprep.subr.bf16.mxu0 0
      %1410 = vmatpush1.bf16.msra.mxu0 0
      %1411 = vmatprep.subr.bf16.mxu0 0
      %1412 = vmatpush1.bf16.msra.mxu0 0
      %1413 = vmatprep.subr.bf16.mxu0 0
      %1414 = vmatpush1.bf16.msra.mxu0 0
      %1415 = vmatprep.subr.bf16.mxu0 0
      %1416 = vmatpush1.bf16.msra.mxu0 0
      %1417 = vmatprep.subr.bf16.mxu0 0
      %1418 = vmatpush1.bf16.msra.mxu0 0
      %1419 = vmatprep.subr.bf16.mxu0 0
      %1420 = vmatpush1.bf16.msra.mxu0 0
      %1421 = vmatprep.mubr.bf16.mxu0 0
      %1422 = vmatmul.mubr.bf16.gmra.mrb[0].mxu0 %v1309
      %v1423 = vpop.f32.mrb[0].mxu0
      %v1424 = vadd.f32 0.0, %v1423
      %v1425 = vpop.f32.mrb[0].mxu0
      %v1426 = vpop.f32.mrb[0].mxu0
      %v1427 = vadd.f32 0.0, %v1426
      %v1428 = vpop.f32.mrb[0].mxu0
      %1429 = vmatprep.mubr.bf16.mxu0 0
      %1430 = vmatmul.mubr.bf16.gmra.mrb[0].mxu0 %v1310
      %v1431 = vpop.f32.mrb[0].mxu0
      %v1432 = vadd.f32 0.0, %v1431
      %v1433 = vpop.f32.mrb[0].mxu0
      %v1434 = vpop.f32.mrb[0].mxu0
      %v1435 = vadd.f32 0.0, %v1434
      %v1436 = vpop.f32.mrb[0].mxu0
      %1437 = vmatprep.mubr.bf16.mxu0 0
      %1438 = vmatmul.mubr.bf16.gmra.mrb[0].mxu0 %v1311
      %v1439 = vpop.f32.mrb[0].mxu0
      %v1440 = vadd.f32 0.0, %v1439
      %v1441 = vpop.f32.mrb[0].mxu0
      %v1442 = vpop.f32.mrb[0].mxu0
      %v1443 = vadd.f32 0.0, %v1442
      %v1444 = vpop.f32.mrb[0].mxu0
      %1445 = vmatprep.mubr.bf16.mxu0 0
      %1446 = vmatmul.mubr.bf16.gmra.mrb[0].mxu0 %v1312
      %v1447 = vpop.f32.mrb[0].mxu0
      %v1448 = vadd.f32 0.0, %v1447
      %v1449 = vpop.f32.mrb[0].mxu0
      %v1450 = vpop.f32.mrb[0].mxu0
      %v1451 = vadd.f32 0.0, %v1450
      %v1452 = vpop.f32.mrb[0].mxu0
      %1453 = vmatprep.mubr.bf16.mxu0 0
      %1454 = vmatmul.mubr.bf16.gmra.mrb[0].mxu0 %v1313
      %v1455 = vpop.f32.mrb[0].mxu0
      %v1456 = vadd.f32 0.0, %v1455
      %v1457 = vpop.f32.mrb[0].mxu0
      %v1458 = vpop.f32.mrb[0].mxu0
      %v1459 = vadd.f32 0.0, %v1458
      %v1460 = vpop.f32.mrb[0].mxu0
      %1461 = vmatprep.mubr.bf16.mxu0 0
      %1462 = vmatmul.mubr.bf16.gmra.mrb[0].mxu0 %v1314
      %v1463 = vpop.f32.mrb[0].mxu0
      %v1464 = vadd.f32 0.0, %v1463
      %v1465 = vpop.f32.mrb[0].mxu0
      %v1466 = vpop.f32.mrb[0].mxu0
      %v1467 = vadd.f32 0.0, %v1466
      %v1468 = vpop.f32.mrb[0].mxu0
      %1469 = vmatprep.mubr.bf16.mxu0 0
      %1470 = vmatmul.mubr.bf16.gmra.mrb[0].mxu0 %v1315
      %v1471 = vpop.f32.mrb[0].mxu0
      %v1472 = vadd.f32 0.0, %v1471
      %v1473 = vpop.f32.mrb[0].mxu0
      %v1474 = vpop.f32.mrb[0].mxu0
      %v1475 = vadd.f32 0.0, %v1474
      %v1476 = vpop.f32.mrb[0].mxu0
      %1477 = vmatprep.mubr.bf16.mxu0 0
      %1478 = vmatmul.mubr.bf16.gmra.mrb[0].mxu0 %v1316
      %v1479 = vpop.f32.mrb[0].mxu0
      %v1480 = vadd.f32 0.0, %v1479
      %v1481 = vpop.f32.mrb[0].mxu0
      %v1482 = vpop.f32.mrb[0].mxu0
      %v1483 = vadd.f32 0.0, %v1482
      %v1484 = vpop.f32.mrb[0].mxu0
      %1485 = vmatprep.mubr.bf16.mxu0 0
      %1486 = vmatmul.mubr.bf16.gmra.mrb[0].mxu0 %v1317
      %v1487 = vpop.f32.mrb[0].mxu0
      %v1488 = vadd.f32 0.0, %v1487
      %v1489 = vpop.f32.mrb[0].mxu0
      %v1490 = vpop.f32.mrb[0].mxu0
      %v1491 = vadd.f32 0.0, %v1490
      %v1492 = vpop.f32.mrb[0].mxu0
      %1493 = vmatprep.mubr.bf16.mxu0 0
      %1494 = vmatmul.mubr.bf16.gmra.mrb[0].mxu0 %v1318
      %v1495 = vpop.f32.mrb[0].mxu0
      %v1496 = vadd.f32 0.0, %v1495
      %v1497 = vpop.f32.mrb[0].mxu0
      %v1498 = vpop.f32.mrb[0].mxu0
      %v1499 = vadd.f32 0.0, %v1498
      %v1500 = vpop.f32.mrb[0].mxu0
      %1501 = vmatprep.mubr.bf16.mxu0 0
      %1502 = vmatmul.mubr.bf16.gmra.mrb[0].mxu0 %v1319
      %v1503 = vpop.f32.mrb[0].mxu0
      %v1504 = vadd.f32 0.0, %v1503
      %v1505 = vpop.f32.mrb[0].mxu0
      %v1506 = vpop.f32.mrb[0].mxu0
      %v1507 = vadd.f32 0.0, %v1506
      %v1508 = vpop.f32.mrb[0].mxu0
      %1509 = vmatprep.mubr.bf16.mxu0 0
      %1510 = vmatmul.mubr.bf16.gmra.mrb[0].mxu0 %v1320
      %v1511 = vpop.f32.mrb[0].mxu0
      %v1512 = vadd.f32 0.0, %v1511
      %v1513 = vpop.f32.mrb[0].mxu0
      %v1514 = vpop.f32.mrb[0].mxu0
      %v1515 = vadd.f32 0.0, %v1514
      %v1516 = vpop.f32.mrb[0].mxu0
      %1517 = vmatprep.mubr.bf16.mxu0 0
      %1518 = vmatmul.mubr.bf16.gmra.mrb[0].mxu0 %v1321
      %v1519 = vpop.f32.mrb[0].mxu0
      %v1520 = vadd.f32 0.0, %v1519
      %v1521 = vpop.f32.mrb[0].mxu0
      %v1522 = vpop.f32.mrb[0].mxu0
      %v1523 = vadd.f32 0.0, %v1522
      %v1524 = vpop.f32.mrb[0].mxu0
      %1525 = vmatprep.mubr.bf16.mxu0 0
      %1526 = vmatmul.mubr.bf16.gmra.mrb[0].mxu0 %v1322
      %v1527 = vpop.f32.mrb[0].mxu0
      %v1528 = vadd.f32 0.0, %v1527
      %v1529 = vpop.f32.mrb[0].mxu0
      %v1530 = vpop.f32.mrb[0].mxu0
      %v1531 = vadd.f32 0.0, %v1530
      %v1532 = vpop.f32.mrb[0].mxu0
      %1533 = vmatprep.mubr.bf16.mxu0 0
      %1534 = vmatmul.mubr.bf16.gmra.mrb[0].mxu0 %v1323
      %v1535 = vpop.f32.mrb[0].mxu0
      %v1536 = vadd.f32 0.0, %v1535
      %v1537 = vpop.f32.mrb[0].mxu0
      %v1538 = vpop.f32.mrb[0].mxu0
      %v1539 = vadd.f32 0.0, %v1538
      %v1540 = vpop.f32.mrb[0].mxu0
      %1541 = vmatprep.mubr.bf16.mxu0 0
      %1542 = vmatmul.mubr.bf16.gmra.mrb[0].mxu0 %v1324
      %v1543 = vpop.f32.mrb[0].mxu0
      %v1544 = vadd.f32 0.0, %v1543
      %v1545 = vpop.f32.mrb[0].mxu0
      %v1546 = vpop.f32.mrb[0].mxu0
      %v1547 = vadd.f32 0.0, %v1546
      %v1548 = vpop.f32.mrb[0].mxu0
      %1549 = vdwg.mxu0
      %v1550 = vadd.f32 %v1228, %v1424
      %v1551 = vadd.f32 %v1229, %v1427
      %v1552 = vadd.f32 %v1230, %v1432
      %v1553 = vadd.f32 %v1231, %v1435
      %v1554 = vadd.f32 %v1232, %v1440
      %v1555 = vadd.f32 %v1233, %v1443
      %v1556 = vadd.f32 %v1234, %v1448
      %v1557 = vadd.f32 %v1235, %v1451
      %v1558 = vadd.f32 %v1236, %v1456
      %v1559 = vadd.f32 %v1237, %v1459
      %v1560 = vadd.f32 %v1238, %v1464
      %v1561 = vadd.f32 %v1239, %v1467
      %v1562 = vadd.f32 %v1240, %v1472
      %v1563 = vadd.f32 %v1241, %v1475
      %v1564 = vadd.f32 %v1242, %v1480
      %v1565 = vadd.f32 %v1243, %v1483
      %v1566 = vadd.f32 %v1244, %v1488
      %v1567 = vadd.f32 %v1245, %v1491
      %v1568 = vadd.f32 %v1246, %v1496
      %v1569 = vadd.f32 %v1247, %v1499
      %v1570 = vadd.f32 %v1248, %v1504
      %v1571 = vadd.f32 %v1249, %v1507
      %v1572 = vadd.f32 %v1250, %v1512
      %v1573 = vadd.f32 %v1251, %v1515
      %v1574 = vadd.f32 %v1252, %v1520
      %v1575 = vadd.f32 %v1253, %v1523
      %v1576 = vadd.f32 %v1254, %v1528
      %v1577 = vadd.f32 %v1255, %v1531
      %v1578 = vadd.f32 %v1256, %v1536
      %v1579 = vadd.f32 %v1257, %v1539
      %v1580 = vadd.f32 %v1258, %v1544
      %v1581 = vadd.f32 %v1259, %v1547
      %1582 = vst [vmem:[#allocation2] sm:$0xff] %v1550
      %1583 = vst [vmem:[#allocation2 + $0x8] sm:$0xff] %v1551
      %1584 = vst [vmem:[#allocation2 + $0x10] sm:$0xff] %v1552
      %1585 = vst [vmem:[#allocation2 + $0x18] sm:$0xff] %v1553
      %1586 = vst [vmem:[#allocation2 + $0x20] sm:$0xff] %v1554
      %1587 = vst [vmem:[#allocation2 + $0x28] sm:$0xff] %v1555
      %1588 = vst [vmem:[#allocation2 + $0x30] sm:$0xff] %v1556
      %1589 = vst [vmem:[#allocation2 + $0x38] sm:$0xff] %v1557
      %1590 = vst [vmem:[#allocation2 + $0x40] sm:$0xff] %v1558
      %1591 = vst [vmem:[#allocation2 + $0x48] sm:$0xff] %v1559
      %1592 = vst [vmem:[#allocation2 + $0x50] sm:$0xff] %v1560
      %1593 = vst [vmem:[#allocation2 + $0x58] sm:$0xff] %v1561
      %1594 = vst [vmem:[#allocation2 + $0x60] sm:$0xff] %v1562
      %1595 = vst [vmem:[#allocation2 + $0x68] sm:$0xff] %v1563
      %1596 = vst [vmem:[#allocation2 + $0x70] sm:$0xff] %v1564
      %1597 = vst [vmem:[#allocation2 + $0x78] sm:$0xff] %v1565
      %1598 = vst [vmem:[#allocation2 + $0x80] sm:$0xff] %v1566
      %1599 = vst [vmem:[#allocation2 + $0x88] sm:$0xff] %v1567
      %1600 = vst [vmem:[#allocation2 + $0x90] sm:$0xff] %v1568
      %1601 = vst [vmem:[#allocation2 + $0x98] sm:$0xff] %v1569
      %1602 = vst [vmem:[#allocation2 + $0xa0] sm:$0xff] %v1570
      %1603 = vst [vmem:[#allocation2 + $0xa8] sm:$0xff] %v1571
      %1604 = vst [vmem:[#allocation2 + $0xb0] sm:$0xff] %v1572
      %1605 = vst [vmem:[#allocation2 + $0xb8] sm:$0xff] %v1573
      %1606 = vst [vmem:[#allocation2 + $0xc0] sm:$0xff] %v1574
      %1607 = vst [vmem:[#allocation2 + $0xc8] sm:$0xff] %v1575
      %1608 = vst [vmem:[#allocation2 + $0xd0] sm:$0xff] %v1576
      %1609 = vst [vmem:[#allocation2 + $0xd8] sm:$0xff] %v1577
      %1610 = vst [vmem:[#allocation2 + $0xe0] sm:$0xff] %v1578
      %1611 = vst [vmem:[#allocation2 + $0xe8] sm:$0xff] %v1579
      %1612 = vst [vmem:[#allocation2 + $0xf0] sm:$0xff] %v1580
      %1613 = vst [vmem:[#allocation2 + $0xf8] sm:$0xff] %v1581
      %v1614 = vld [vmem:[%s343] sm:$0xe]
      %v1615 = vld [vmem:[%s343 + $0x4] sm:$0xf]
      %v1616 = vld [vmem:[%s343 + $0x8] sm:$0x1]
      %v1617 = vld [vmem:[%s343 + $0xc] sm:$0xe]
      %v1618 = vld [vmem:[%s343 + $0x10] sm:$0xf]
      %v1619 = vld [vmem:[%s343 + $0x14] sm:$0x1]
      %v1620 = vld [vmem:[%s343 + $0x18] sm:$0xe]
      %v1621 = vld [vmem:[%s343 + $0x1c] sm:$0xf]
      %v1622 = vld [vmem:[%s343 + $0x20] sm:$0x1]
      %v1623 = vld [vmem:[%s343 + $0x24] sm:$0xe]
      %v1624 = vld [vmem:[%s343 + $0x28] sm:$0xf]
      %v1625 = vld [vmem:[%s343 + $0x2c] sm:$0x1]
      %v1626 = vld [vmem:[%s343 + $0x30] sm:$0xe]
      %v1627 = vld [vmem:[%s343 + $0x34] sm:$0xf]
      %v1628 = vld [vmem:[%s343 + $0x38] sm:$0x1]
      %v1629 = vld [vmem:[%s343 + $0x3c] sm:$0xe]
      %v1630 = vld [vmem:[%s343 + $0x40] sm:$0xf]
      %v1631 = vld [vmem:[%s343 + $0x44] sm:$0x1]
      %v1632 = vld [vmem:[%s343 + $0x48] sm:$0xe]
      %v1633 = vld [vmem:[%s343 + $0x4c] sm:$0xf]
      %v1634 = vld [vmem:[%s343 + $0x50] sm:$0x1]
      %v1635 = vld [vmem:[%s343 + $0x54] sm:$0xe]
      %v1636 = vld [vmem:[%s343 + $0x58] sm:$0xf]
      %v1637 = vld [vmem:[%s343 + $0x5c] sm:$0x1]
      %v1638 = vld [vmem:[%s343 + $0x60] sm:$0xe]
      %v1639 = vld [vmem:[%s343 + $0x64] sm:$0xf]
      %v1640 = vld [vmem:[%s343 + $0x68] sm:$0x1]
      %v1641 = vld [vmem:[%s343 + $0x6c] sm:$0xe]
      %v1642 = vld [vmem:[%s343 + $0x70] sm:$0xf]
      %v1643 = vld [vmem:[%s343 + $0x74] sm:$0x1]
      %v1644 = vld [vmem:[%s343 + $0x78] sm:$0xe]
      %v1645 = vld [vmem:[%s343 + $0x7c] sm:$0xf]
      %v1646 = vld [vmem:[%s343 + $0x80] sm:$0x1]
      %v1647 = vld [vmem:[%s343 + $0x84] sm:$0xe]
      %v1648 = vld [vmem:[%s343 + $0x88] sm:$0xf]
      %v1649 = vld [vmem:[%s343 + $0x8c] sm:$0x1]
      %v1650 = vld [vmem:[%s343 + $0x90] sm:$0xe]
      %v1651 = vld [vmem:[%s343 + $0x94] sm:$0xf]
      %v1652 = vld [vmem:[%s343 + $0x98] sm:$0x1]
      %v1653 = vld [vmem:[%s343 + $0x9c] sm:$0xe]
      %v1654 = vld [vmem:[%s343 + $0xa0] sm:$0xf]
      %v1655 = vld [vmem:[%s343 + $0xa4] sm:$0x1]
      %v1656 = vld [vmem:[%s343 + $0xa8] sm:$0xe]
      %v1657 = vld [vmem:[%s343 + $0xac] sm:$0xf]
      %v1658 = vld [vmem:[%s343 + $0xb0] sm:$0x1]
      %v1659 = vld [vmem:[%s343 + $0xb4] sm:$0xe]
      %v1660 = vld [vmem:[%s343 + $0xb8] sm:$0xf]
      %v1661 = vld [vmem:[%s343 + $0xbc] sm:$0x1]
      %vm1710 = vcmask 1042432
      %vm1711 = vcmask 1046532
      %vm1712 = vmor %vm1710, %vm1711
      %v1713 = vrot.slane %v1614, 5
      %v1714 = vrot.slane %v1713, 4
      %v1715 = vrot.slane %v1615, 5
      %v1716 = vsel %vm1712, %v1714, %v1715
      %v1717 = vrot.slane %v1715, 4
      %v1718 = vrot.slane %v1616, 5
      %v1719 = vsel %vm1712, %v1717, %v1718
      %v1720 = vrot.slane %v1617, 5
      %v1721 = vrot.slane %v1720, 4
      %v1722 = vrot.slane %v1618, 5
      %v1723 = vsel %vm1712, %v1721, %v1722
      %v1724 = vrot.slane %v1722, 4
      %v1725 = vrot.slane %v1619, 5
      %v1726 = vsel %vm1712, %v1724, %v1725
      %v1727 = vrot.slane %v1620, 5
      %v1728 = vrot.slane %v1727, 4
      %v1729 = vrot.slane %v1621, 5
      %v1730 = vsel %vm1712, %v1728, %v1729
      %v1731 = vrot.slane %v1729, 4
      %v1732 = vrot.slane %v1622, 5
      %v1733 = vsel %vm1712, %v1731, %v1732
      %v1734 = vrot.slane %v1623, 5
      %v1735 = vrot.slane %v1734, 4
      %v1736 = vrot.slane %v1624, 5
      %v1737 = vsel %vm1712, %v1735, %v1736
      %v1738 = vrot.slane %v1736, 4
      %v1739 = vrot.slane %v1625, 5
      %v1740 = vsel %vm1712, %v1738, %v1739
      %v1741 = vrot.slane %v1626, 5
      %v1742 = vrot.slane %v1741, 4
      %v1743 = vrot.slane %v1627, 5
      %v1744 = vsel %vm1712, %v1742, %v1743
      %v1745 = vrot.slane %v1743, 4
      %v1746 = vrot.slane %v1628, 5
      %v1747 = vsel %vm1712, %v1745, %v1746
      %v1748 = vrot.slane %v1629, 5
      %v1749 = vrot.slane %v1748, 4
      %v1750 = vrot.slane %v1630, 5
      %v1751 = vsel %vm1712, %v1749, %v1750
      %v1752 = vrot.slane %v1750, 4
      %v1753 = vrot.slane %v1631, 5
      %v1754 = vsel %vm1712, %v1752, %v1753
      %v1755 = vrot.slane %v1632, 5
      %v1756 = vrot.slane %v1755, 4
      %v1757 = vrot.slane %v1633, 5
      %v1758 = vsel %vm1712, %v1756, %v1757
      %v1759 = vrot.slane %v1757, 4
      %v1760 = vrot.slane %v1634, 5
      %v1761 = vsel %vm1712, %v1759, %v1760
      %v1762 = vrot.slane %v1635, 5
      %v1763 = vrot.slane %v1762, 4
      %v1764 = vrot.slane %v1636, 5
      %v1765 = vsel %vm1712, %v1763, %v1764
      %v1766 = vrot.slane %v1764, 4
      %v1767 = vrot.slane %v1637, 5
      %v1768 = vsel %vm1712, %v1766, %v1767
      %v1769 = vrot.slane %v1638, 5
      %v1770 = vrot.slane %v1769, 4
      %v1771 = vrot.slane %v1639, 5
      %v1772 = vsel %vm1712, %v1770, %v1771
      %v1773 = vrot.slane %v1771, 4
      %v1774 = vrot.slane %v1640, 5
      %v1775 = vsel %vm1712, %v1773, %v1774
      %v1776 = vrot.slane %v1641, 5
      %v1777 = vrot.slane %v1776, 4
      %v1778 = vrot.slane %v1642, 5
      %v1779 = vsel %vm1712, %v1777, %v1778
      %v1780 = vrot.slane %v1778, 4
      %v1781 = vrot.slane %v1643, 5
      %v1782 = vsel %vm1712, %v1780, %v1781
      %v1783 = vrot.slane %v1644, 5
      %v1784 = vrot.slane %v1783, 4
      %v1785 = vrot.slane %v1645, 5
      %v1786 = vsel %vm1712, %v1784, %v1785
      %v1787 = vrot.slane %v1785, 4
      %v1788 = vrot.slane %v1646, 5
      %v1789 = vsel %vm1712, %v1787, %v1788
      %v1790 = vrot.slane %v1647, 5
      %v1791 = vrot.slane %v1790, 4
      %v1792 = vrot.slane %v1648, 5
      %v1793 = vsel %vm1712, %v1791, %v1792
      %v1794 = vrot.slane %v1792, 4
      %v1795 = vrot.slane %v1649, 5
      %v1796 = vsel %vm1712, %v1794, %v1795
      %v1797 = vrot.slane %v1650, 5
      %v1798 = vrot.slane %v1797, 4
      %v1799 = vrot.slane %v1651, 5
      %v1800 = vsel %vm1712, %v1798, %v1799
      %v1801 = vrot.slane %v1799, 4
      %v1802 = vrot.slane %v1652, 5
      %v1803 = vsel %vm1712, %v1801, %v1802
      %v1804 = vrot.slane %v1653, 5
      %v1805 = vrot.slane %v1804, 4
      %v1806 = vrot.slane %v1654, 5
      %v1807 = vsel %vm1712, %v1805, %v1806
      %v1808 = vrot.slane %v1806, 4
      %v1809 = vrot.slane %v1655, 5
      %v1810 = vsel %vm1712, %v1808, %v1809
      %v1811 = vrot.slane %v1656, 5
      %v1812 = vrot.slane %v1811, 4
      %v1813 = vrot.slane %v1657, 5
      %v1814 = vsel %vm1712, %v1812, %v1813
      %v1815 = vrot.slane %v1813, 4
      %v1816 = vrot.slane %v1658, 5
      %v1817 = vsel %vm1712, %v1815, %v1816
      %v1818 = vrot.slane %v1659, 5
      %v1819 = vrot.slane %v1818, 4
      %v1820 = vrot.slane %v1660, 5
      %v1821 = vsel %vm1712, %v1819, %v1820
      %v1822 = vrot.slane %v1820, 4
      %v1823 = vrot.slane %v1661, 5
      %v1824 = vsel %vm1712, %v1822, %v1823
      %v1825 = vld [vmem:[#allocation2] sm:$0xff]
      %v1826 = vld [vmem:[#allocation2 + $0x8] sm:$0xff]
      %v1827 = vld [vmem:[#allocation2 + $0x10] sm:$0xff]
      %v1828 = vld [vmem:[#allocation2 + $0x18] sm:$0xff]
      %v1829 = vld [vmem:[#allocation2 + $0x20] sm:$0xff]
      %v1830 = vld [vmem:[#allocation2 + $0x28] sm:$0xff]
      %v1831 = vld [vmem:[#allocation2 + $0x30] sm:$0xff]
      %v1832 = vld [vmem:[#allocation2 + $0x38] sm:$0xff]
      %v1833 = vld [vmem:[#allocation2 + $0x40] sm:$0xff]
      %v1834 = vld [vmem:[#allocation2 + $0x48] sm:$0xff]
      %v1835 = vld [vmem:[#allocation2 + $0x50] sm:$0xff]
      %v1836 = vld [vmem:[#allocation2 + $0x58] sm:$0xff]
      %v1837 = vld [vmem:[#allocation2 + $0x60] sm:$0xff]
      %v1838 = vld [vmem:[#allocation2 + $0x68] sm:$0xff]
      %v1839 = vld [vmem:[#allocation2 + $0x70] sm:$0xff]
      %v1840 = vld [vmem:[#allocation2 + $0x78] sm:$0xff]
      %v1841 = vld [vmem:[#allocation2 + $0x80] sm:$0xff]
      %v1842 = vld [vmem:[#allocation2 + $0x88] sm:$0xff]
      %v1843 = vld [vmem:[#allocation2 + $0x90] sm:$0xff]
      %v1844 = vld [vmem:[#allocation2 + $0x98] sm:$0xff]
      %v1845 = vld [vmem:[#allocation2 + $0xa0] sm:$0xff]
      %v1846 = vld [vmem:[#allocation2 + $0xa8] sm:$0xff]
      %v1847 = vld [vmem:[#allocation2 + $0xb0] sm:$0xff]
      %v1848 = vld [vmem:[#allocation2 + $0xb8] sm:$0xff]
      %v1849 = vld [vmem:[#allocation2 + $0xc0] sm:$0xff]
      %v1850 = vld [vmem:[#allocation2 + $0xc8] sm:$0xff]
      %v1851 = vld [vmem:[#allocation2 + $0xd0] sm:$0xff]
      %v1852 = vld [vmem:[#allocation2 + $0xd8] sm:$0xff]
      %v1853 = vld [vmem:[#allocation2 + $0xe0] sm:$0xff]
      %v1854 = vld [vmem:[#allocation2 + $0xe8] sm:$0xff]
      %v1855 = vld [vmem:[#allocation2 + $0xf0] sm:$0xff]
      %v1856 = vld [vmem:[#allocation2 + $0xf8] sm:$0xff]
      %s1857 = scalar_lea.vmem %s282, 128
      %v1858 = vld [vmem:[%s1857] sm:$0xf]
      %v1859 = vld [vmem:[%s1857 + $0x4] sm:$0xf]
      %v1860 = vld [vmem:[%s1857 + $0x8] sm:$0xf]
      %v1861 = vld [vmem:[%s1857 + $0xc] sm:$0xf]
      %v1862 = vld [vmem:[%s1857 + $0x10] sm:$0xf]
      %v1863 = vld [vmem:[%s1857 + $0x14] sm:$0xf]
      %v1864 = vld [vmem:[%s1857 + $0x18] sm:$0xf]
      %v1865 = vld [vmem:[%s1857 + $0x1c] sm:$0xf]
      %v1866 = vld [vmem:[%s1857 + $0x20] sm:$0xf]
      %v1867 = vld [vmem:[%s1857 + $0x24] sm:$0xf]
      %v1868 = vld [vmem:[%s1857 + $0x28] sm:$0xf]
      %v1869 = vld [vmem:[%s1857 + $0x2c] sm:$0xf]
      %v1870 = vld [vmem:[%s1857 + $0x30] sm:$0xf]
      %v1871 = vld [vmem:[%s1857 + $0x34] sm:$0xf]
      %v1872 = vld [vmem:[%s1857 + $0x38] sm:$0xf]
      %v1873 = vld [vmem:[%s1857 + $0x3c] sm:$0xf]
      %v1874 = vunpack.c.l.b16 %v1716
      %v1875 = vunpack.c.l.b16 %v1719
      %v1876 = vunpack.c.l.b16 %v1723
      %v1877 = vunpack.c.l.b16 %v1726
      %v1878 = vunpack.c.l.b16 %v1730
      %v1879 = vunpack.c.l.b16 %v1733
      %v1880 = vunpack.c.l.b16 %v1737
      %v1881 = vunpack.c.l.b16 %v1740
      %v1882 = vunpack.c.l.b16 %v1744
      %v1883 = vunpack.c.l.b16 %v1747
      %v1884 = vunpack.c.l.b16 %v1751
      %v1885 = vunpack.c.l.b16 %v1754
      %v1886 = vunpack.c.l.b16 %v1758
      %v1887 = vunpack.c.l.b16 %v1761
      %v1888 = vunpack.c.l.b16 %v1765
      %v1889 = vunpack.c.l.b16 %v1768
      %v1890 = vunpack.c.l.b16 %v1772
      %v1891 = vunpack.c.l.b16 %v1775
      %v1892 = vunpack.c.l.b16 %v1779
      %v1893 = vunpack.c.l.b16 %v1782
      %v1894 = vunpack.c.l.b16 %v1786
      %v1895 = vunpack.c.l.b16 %v1789
      %v1896 = vunpack.c.l.b16 %v1793
      %v1897 = vunpack.c.l.b16 %v1796
      %v1898 = vunpack.c.l.b16 %v1800
      %v1899 = vunpack.c.l.b16 %v1803
      %v1900 = vunpack.c.l.b16 %v1807
      %v1901 = vunpack.c.l.b16 %v1810
      %v1902 = vunpack.c.l.b16 %v1814
      %v1903 = vunpack.c.l.b16 %v1817
      %v1904 = vunpack.c.l.b16 %v1821
      %v1905 = vunpack.c.l.b16 %v1824
      %v1906 = vpack.c.b16 %v1875, %v1874
      %v1907 = vpack.c.b16 %v1877, %v1876
      %v1908 = vpack.c.b16 %v1879, %v1878
      %v1909 = vpack.c.b16 %v1881, %v1880
      %v1910 = vpack.c.b16 %v1883, %v1882
      %v1911 = vpack.c.b16 %v1885, %v1884
      %v1912 = vpack.c.b16 %v1887, %v1886
      %v1913 = vpack.c.b16 %v1889, %v1888
      %v1914 = vpack.c.b16 %v1891, %v1890
      %v1915 = vpack.c.b16 %v1893, %v1892
      %v1916 = vpack.c.b16 %v1895, %v1894
      %v1917 = vpack.c.b16 %v1897, %v1896
      %v1918 = vpack.c.b16 %v1899, %v1898
      %v1919 = vpack.c.b16 %v1901, %v1900
      %v1920 = vpack.c.b16 %v1903, %v1902
      %v1921 = vpack.c.b16 %v1905, %v1904
      %v1954 = vunpack.c.l.b16 %v1858
      %v1955 = vunpack.c.l.b16 %v1859
      %v1956 = vunpack.c.l.b16 %v1860
      %v1957 = vunpack.c.l.b16 %v1861
      %v1958 = vunpack.c.l.b16 %v1862
      %v1959 = vunpack.c.l.b16 %v1863
      %v1960 = vunpack.c.l.b16 %v1864
      %v1961 = vunpack.c.l.b16 %v1865
      %v1962 = vunpack.c.l.b16 %v1866
      %v1963 = vunpack.c.l.b16 %v1867
      %v1964 = vunpack.c.l.b16 %v1868
      %v1965 = vunpack.c.l.b16 %v1869
      %v1966 = vunpack.c.l.b16 %v1870
      %v1967 = vunpack.c.l.b16 %v1871
      %v1968 = vunpack.c.l.b16 %v1872
      %v1969 = vunpack.c.l.b16 %v1873
      %v1970 = vpack.c.b16 %v1955, %v1954
      %v1971 = vpack.c.b16 %v1957, %v1956
      %v1972 = vpack.c.b16 %v1959, %v1958
      %v1973 = vpack.c.b16 %v1961, %v1960
      %v1974 = vpack.c.b16 %v1963, %v1962
      %v1975 = vpack.c.b16 %v1965, %v1964
      %v1976 = vpack.c.b16 %v1967, %v1966
      %v1977 = vpack.c.b16 %v1969, %v1968
      %1986 = vmatprep.subr.bf16.mxu0 0
      %1987 = vmatpush1.bf16.msra.mxu0 %v1970
      %1988 = vmatprep.subr.bf16.mxu0 0
      %1989 = vmatpush1.bf16.msra.mxu0 %v1971
      %1990 = vmatprep.subr.bf16.mxu0 0
      %1991 = vmatpush1.bf16.msra.mxu0 %v1972
      %1992 = vmatprep.subr.bf16.mxu0 0
      %1993 = vmatpush1.bf16.msra.mxu0 %v1973
      %1994 = vmatprep.subr.bf16.mxu0 0
      %1995 = vmatpush1.bf16.msra.mxu0 %v1974
      %1996 = vmatprep.subr.bf16.mxu0 0
      %1997 = vmatpush1.bf16.msra.mxu0 %v1975
      %1998 = vmatprep.subr.bf16.mxu0 0
      %1999 = vmatpush1.bf16.msra.mxu0 %v1976
      %2000 = vmatprep.subr.bf16.mxu0 0
      %2001 = vmatpush1.bf16.msra.mxu0 %v1977
      %2002 = vmatprep.subr.bf16.mxu0 0
      %2003 = vmatpush1.bf16.msra.mxu0 0
      %2004 = vmatprep.subr.bf16.mxu0 0
      %2005 = vmatpush1.bf16.msra.mxu0 0
      %2006 = vmatprep.subr.bf16.mxu0 0
      %2007 = vmatpush1.bf16.msra.mxu0 0
      %2008 = vmatprep.subr.bf16.mxu0 0
      %2009 = vmatpush1.bf16.msra.mxu0 0
      %2010 = vmatprep.subr.bf16.mxu0 0
      %2011 = vmatpush1.bf16.msra.mxu0 0
      %2012 = vmatprep.subr.bf16.mxu0 0
      %2013 = vmatpush1.bf16.msra.mxu0 0
      %2014 = vmatprep.subr.bf16.mxu0 0
      %2015 = vmatpush1.bf16.msra.mxu0 0
      %2016 = vmatprep.subr.bf16.mxu0 0
      %2017 = vmatpush1.bf16.msra.mxu0 0
      %2018 = vmatprep.mubr.bf16.mxu0 0
      %2019 = vmatmul.mubr.bf16.gmra.mrb[0].mxu0 %v1906
      %v2020 = vpop.f32.mrb[0].mxu0
      %v2021 = vadd.f32 0.0, %v2020
      %v2022 = vpop.f32.mrb[0].mxu0
      %v2023 = vpop.f32.mrb[0].mxu0
      %v2024 = vadd.f32 0.0, %v2023
      %v2025 = vpop.f32.mrb[0].mxu0
      %2026 = vmatprep.mubr.bf16.mxu0 0
      %2027 = vmatmul.mubr.bf16.gmra.mrb[0].mxu0 %v1907
      %v2028 = vpop.f32.mrb[0].mxu0
      %v2029 = vadd.f32 0.0, %v2028
      %v2030 = vpop.f32.mrb[0].mxu0
      %v2031 = vpop.f32.mrb[0].mxu0
      %v2032 = vadd.f32 0.0, %v2031
      %v2033 = vpop.f32.mrb[0].mxu0
      %2034 = vmatprep.mubr.bf16.mxu0 0
      %2035 = vmatmul.mubr.bf16.gmra.mrb[0].mxu0 %v1908
      %v2036 = vpop.f32.mrb[0].mxu0
      %v2037 = vadd.f32 0.0, %v2036
      %v2038 = vpop.f32.mrb[0].mxu0
      %v2039 = vpop.f32.mrb[0].mxu0
      %v2040 = vadd.f32 0.0, %v2039
      %v2041 = vpop.f32.mrb[0].mxu0
      %2042 = vmatprep.mubr.bf16.mxu0 0
      %2043 = vmatmul.mubr.bf16.gmra.mrb[0].mxu0 %v1909
      %v2044 = vpop.f32.mrb[0].mxu0
      %v2045 = vadd.f32 0.0, %v2044
      %v2046 = vpop.f32.mrb[0].mxu0
      %v2047 = vpop.f32.mrb[0].mxu0
      %v2048 = vadd.f32 0.0, %v2047
      %v2049 = vpop.f32.mrb[0].mxu0
      %2050 = vmatprep.mubr.bf16.mxu0 0
      %2051 = vmatmul.mubr.bf16.gmra.mrb[0].mxu0 %v1910
      %v2052 = vpop.f32.mrb[0].mxu0
      %v2053 = vadd.f32 0.0, %v2052
      %v2054 = vpop.f32.mrb[0].mxu0
      %v2055 = vpop.f32.mrb[0].mxu0
      %v2056 = vadd.f32 0.0, %v2055
      %v2057 = vpop.f32.mrb[0].mxu0
      %2058 = vmatprep.mubr.bf16.mxu0 0
      %2059 = vmatmul.mubr.bf16.gmra.mrb[0].mxu0 %v1911
      %v2060 = vpop.f32.mrb[0].mxu0
      %v2061 = vadd.f32 0.0, %v2060
      %v2062 = vpop.f32.mrb[0].mxu0
      %v2063 = vpop.f32.mrb[0].mxu0
      %v2064 = vadd.f32 0.0, %v2063
      %v2065 = vpop.f32.mrb[0].mxu0
      %2066 = vmatprep.mubr.bf16.mxu0 0
      %2067 = vmatmul.mubr.bf16.gmra.mrb[0].mxu0 %v1912
      %v2068 = vpop.f32.mrb[0].mxu0
      %v2069 = vadd.f32 0.0, %v2068
      %v2070 = vpop.f32.mrb[0].mxu0
      %v2071 = vpop.f32.mrb[0].mxu0
      %v2072 = vadd.f32 0.0, %v2071
      %v2073 = vpop.f32.mrb[0].mxu0
      %2074 = vmatprep.mubr.bf16.mxu0 0
      %2075 = vmatmul.mubr.bf16.gmra.mrb[0].mxu0 %v1913
      %v2076 = vpop.f32.mrb[0].mxu0
      %v2077 = vadd.f32 0.0, %v2076
      %v2078 = vpop.f32.mrb[0].mxu0
      %v2079 = vpop.f32.mrb[0].mxu0
      %v2080 = vadd.f32 0.0, %v2079
      %v2081 = vpop.f32.mrb[0].mxu0
      %2082 = vmatprep.mubr.bf16.mxu0 0
      %2083 = vmatmul.mubr.bf16.gmra.mrb[0].mxu0 %v1914
      %v2084 = vpop.f32.mrb[0].mxu0
      %v2085 = vadd.f32 0.0, %v2084
      %v2086 = vpop.f32.mrb[0].mxu0
      %v2087 = vpop.f32.mrb[0].mxu0
      %v2088 = vadd.f32 0.0, %v2087
      %v2089 = vpop.f32.mrb[0].mxu0
      %2090 = vmatprep.mubr.bf16.mxu0 0
      %2091 = vmatmul.mubr.bf16.gmra.mrb[0].mxu0 %v1915
      %v2092 = vpop.f32.mrb[0].mxu0
      %v2093 = vadd.f32 0.0, %v2092
      %v2094 = vpop.f32.mrb[0].mxu0
      %v2095 = vpop.f32.mrb[0].mxu0
      %v2096 = vadd.f32 0.0, %v2095
      %v2097 = vpop.f32.mrb[0].mxu0
      %2098 = vmatprep.mubr.bf16.mxu0 0
      %2099 = vmatmul.mubr.bf16.gmra.mrb[0].mxu0 %v1916
      %v2100 = vpop.f32.mrb[0].mxu0
      %v2101 = vadd.f32 0.0, %v2100
      %v2102 = vpop.f32.mrb[0].mxu0
      %v2103 = vpop.f32.mrb[0].mxu0
      %v2104 = vadd.f32 0.0, %v2103
      %v2105 = vpop.f32.mrb[0].mxu0
      %2106 = vmatprep.mubr.bf16.mxu0 0
      %2107 = vmatmul.mubr.bf16.gmra.mrb[0].mxu0 %v1917
      %v2108 = vpop.f32.mrb[0].mxu0
      %v2109 = vadd.f32 0.0, %v2108
      %v2110 = vpop.f32.mrb[0].mxu0
      %v2111 = vpop.f32.mrb[0].mxu0
      %v2112 = vadd.f32 0.0, %v2111
      %v2113 = vpop.f32.mrb[0].mxu0
      %2114 = vmatprep.mubr.bf16.mxu0 0
      %2115 = vmatmul.mubr.bf16.gmra.mrb[0].mxu0 %v1918
      %v2116 = vpop.f32.mrb[0].mxu0
      %v2117 = vadd.f32 0.0, %v2116
      %v2118 = vpop.f32.mrb[0].mxu0
      %v2119 = vpop.f32.mrb[0].mxu0
      %v2120 = vadd.f32 0.0, %v2119
      %v2121 = vpop.f32.mrb[0].mxu0
      %2122 = vmatprep.mubr.bf16.mxu0 0
      %2123 = vmatmul.mubr.bf16.gmra.mrb[0].mxu0 %v1919
      %v2124 = vpop.f32.mrb[0].mxu0
      %v2125 = vadd.f32 0.0, %v2124
      %v2126 = vpop.f32.mrb[0].mxu0
      %v2127 = vpop.f32.mrb[0].mxu0
      %v2128 = vadd.f32 0.0, %v2127
      %v2129 = vpop.f32.mrb[0].mxu0
      %2130 = vmatprep.mubr.bf16.mxu0 0
      %2131 = vmatmul.mubr.bf16.gmra.mrb[0].mxu0 %v1920
      %v2132 = vpop.f32.mrb[0].mxu0
      %v2133 = vadd.f32 0.0, %v2132
      %v2134 = vpop.f32.mrb[0].mxu0
      %v2135 = vpop.f32.mrb[0].mxu0
      %v2136 = vadd.f32 0.0, %v2135
      %v2137 = vpop.f32.mrb[0].mxu0
      %2138 = vmatprep.mubr.bf16.mxu0 0
      %2139 = vmatmul.mubr.bf16.gmra.mrb[0].mxu0 %v1921
      %v2140 = vpop.f32.mrb[0].mxu0
      %v2141 = vadd.f32 0.0, %v2140
      %v2142 = vpop.f32.mrb[0].mxu0
      %v2143 = vpop.f32.mrb[0].mxu0
      %v2144 = vadd.f32 0.0, %v2143
      %v2145 = vpop.f32.mrb[0].mxu0
      %2146 = vdwg.mxu0
      %v2147 = vadd.f32 %v1825, %v2021
      %v2148 = vadd.f32 %v1826, %v2024
      %v2149 = vadd.f32 %v1827, %v2029
      %v2150 = vadd.f32 %v1828, %v2032
      %v2151 = vadd.f32 %v1829, %v2037
      %v2152 = vadd.f32 %v1830, %v2040
      %v2153 = vadd.f32 %v1831, %v2045
      %v2154 = vadd.f32 %v1832, %v2048
      %v2155 = vadd.f32 %v1833, %v2053
      %v2156 = vadd.f32 %v1834, %v2056
      %v2157 = vadd.f32 %v1835, %v2061
      %v2158 = vadd.f32 %v1836, %v2064
      %v2159 = vadd.f32 %v1837, %v2069
      %v2160 = vadd.f32 %v1838, %v2072
      %v2161 = vadd.f32 %v1839, %v2077
      %v2162 = vadd.f32 %v1840, %v2080
      %v2163 = vadd.f32 %v1841, %v2085
      %v2164 = vadd.f32 %v1842, %v2088
      %v2165 = vadd.f32 %v1843, %v2093
      %v2166 = vadd.f32 %v1844, %v2096
      %v2167 = vadd.f32 %v1845, %v2101
      %v2168 = vadd.f32 %v1846, %v2104
      %v2169 = vadd.f32 %v1847, %v2109
      %v2170 = vadd.f32 %v1848, %v2112
      %v2171 = vadd.f32 %v1849, %v2117
      %v2172 = vadd.f32 %v1850, %v2120
      %v2173 = vadd.f32 %v1851, %v2125
      %v2174 = vadd.f32 %v1852, %v2128
      %v2175 = vadd.f32 %v1853, %v2133
      %v2176 = vadd.f32 %v1854, %v2136
      %v2177 = vadd.f32 %v1855, %v2141
      %v2178 = vadd.f32 %v1856, %v2144
      %2179 = vst [vmem:[#allocation2] sm:$0xff] %v2147
      %2180 = vst [vmem:[#allocation2 + $0x8] sm:$0xff] %v2148
      %2181 = vst [vmem:[#allocation2 + $0x10] sm:$0xff] %v2149
      %2182 = vst [vmem:[#allocation2 + $0x18] sm:$0xff] %v2150
      %2183 = vst [vmem:[#allocation2 + $0x20] sm:$0xff] %v2151
      %2184 = vst [vmem:[#allocation2 + $0x28] sm:$0xff] %v2152
      %2185 = vst [vmem:[#allocation2 + $0x30] sm:$0xff] %v2153
      %2186 = vst [vmem:[#allocation2 + $0x38] sm:$0xff] %v2154
      %2187 = vst [vmem:[#allocation2 + $0x40] sm:$0xff] %v2155
      %2188 = vst [vmem:[#allocation2 + $0x48] sm:$0xff] %v2156
      %2189 = vst [vmem:[#allocation2 + $0x50] sm:$0xff] %v2157
      %2190 = vst [vmem:[#allocation2 + $0x58] sm:$0xff] %v2158
      %2191 = vst [vmem:[#allocation2 + $0x60] sm:$0xff] %v2159
      %2192 = vst [vmem:[#allocation2 + $0x68] sm:$0xff] %v2160
      %2193 = vst [vmem:[#allocation2 + $0x70] sm:$0xff] %v2161
      %2194 = vst [vmem:[#allocation2 + $0x78] sm:$0xff] %v2162
      %2195 = vst [vmem:[#allocation2 + $0x80] sm:$0xff] %v2163
      %2196 = vst [vmem:[#allocation2 + $0x88] sm:$0xff] %v2164
      %2197 = vst [vmem:[#allocation2 + $0x90] sm:$0xff] %v2165
      %2198 = vst [vmem:[#allocation2 + $0x98] sm:$0xff] %v2166
      %2199 = vst [vmem:[#allocation2 + $0xa0] sm:$0xff] %v2167
      %2200 = vst [vmem:[#allocation2 + $0xa8] sm:$0xff] %v2168
      %2201 = vst [vmem:[#allocation2 + $0xb0] sm:$0xff] %v2169
      %2202 = vst [vmem:[#allocation2 + $0xb8] sm:$0xff] %v2170
      %2203 = vst [vmem:[#allocation2 + $0xc0] sm:$0xff] %v2171
      %2204 = vst [vmem:[#allocation2 + $0xc8] sm:$0xff] %v2172
      %2205 = vst [vmem:[#allocation2 + $0xd0] sm:$0xff] %v2173
      %2206 = vst [vmem:[#allocation2 + $0xd8] sm:$0xff] %v2174
      %2207 = vst [vmem:[#allocation2 + $0xe0] sm:$0xff] %v2175
      %2208 = vst [vmem:[#allocation2 + $0xe8] sm:$0xff] %v2176
      %2209 = vst [vmem:[#allocation2 + $0xf0] sm:$0xff] %v2177
      %2210 = vst [vmem:[#allocation2 + $0xf8] sm:$0xff] %v2178
      %p2211 = scmp.eq.s32.totalorder %s24, 2
      // Predicated region
      $region41: #{basic_conv2d_forward.1} parent=35 // pred_check
        %p2212 = pneg %p2211
      $region42: #{basic_conv2d_forward.1} parent=35 // pred_check_branch
        %2214 = sbr.rel (%p2212) target = $region44
      $region43: #{basic_conv2d_forward.1} parent=35 // pred_region
        %v2215 = vld [vmem:[#allocation2] sm:$0xff]
        %v2216 = vld [vmem:[#allocation2 + $0x8] sm:$0xff]
        %v2217 = vld [vmem:[#allocation2 + $0x10] sm:$0xff]
        %v2218 = vld [vmem:[#allocation2 + $0x18] sm:$0xff]
        %v2219 = vld [vmem:[#allocation2 + $0x20] sm:$0xff]
        %v2220 = vld [vmem:[#allocation2 + $0x28] sm:$0xff]
        %v2221 = vld [vmem:[#allocation2 + $0x30] sm:$0xff]
        %v2222 = vld [vmem:[#allocation2 + $0x38] sm:$0xff]
        %v2223 = vld [vmem:[#allocation2 + $0x40] sm:$0xff]
        %v2224 = vld [vmem:[#allocation2 + $0x48] sm:$0xff]
        %v2225 = vld [vmem:[#allocation2 + $0x50] sm:$0xff]
        %v2226 = vld [vmem:[#allocation2 + $0x58] sm:$0xff]
        %v2227 = vld [vmem:[#allocation2 + $0x60] sm:$0xff]
        %v2228 = vld [vmem:[#allocation2 + $0x68] sm:$0xff]
        %v2229 = vld [vmem:[#allocation2 + $0x70] sm:$0xff]
        %v2230 = vld [vmem:[#allocation2 + $0x78] sm:$0xff]
        %v2231 = vld [vmem:[#allocation2 + $0x80] sm:$0xff]
        %v2232 = vld [vmem:[#allocation2 + $0x88] sm:$0xff]
        %v2233 = vld [vmem:[#allocation2 + $0x90] sm:$0xff]
        %v2234 = vld [vmem:[#allocation2 + $0x98] sm:$0xff]
        %v2235 = vld [vmem:[#allocation2 + $0xa0] sm:$0xff]
        %v2236 = vld [vmem:[#allocation2 + $0xa8] sm:$0xff]
        %v2237 = vld [vmem:[#allocation2 + $0xb0] sm:$0xff]
        %v2238 = vld [vmem:[#allocation2 + $0xb8] sm:$0xff]
        %v2239 = vld [vmem:[#allocation2 + $0xc0] sm:$0xff]
        %v2240 = vld [vmem:[#allocation2 + $0xc8] sm:$0xff]
        %v2241 = vld [vmem:[#allocation2 + $0xd0] sm:$0xff]
        %v2242 = vld [vmem:[#allocation2 + $0xd8] sm:$0xff]
        %v2243 = vld [vmem:[#allocation2 + $0xe0] sm:$0xff]
        %v2244 = vld [vmem:[#allocation2 + $0xe8] sm:$0xff]
        %v2245 = vld [vmem:[#allocation2 + $0xf0] sm:$0xff]
        %v2246 = vld [vmem:[#allocation2 + $0xf8] sm:$0xff]
        %v2247 = vld [vmem:[%s285] sm:$0x1]
        %v2249 = vlaneseq
        %v2250 = vshrl.u32 %v2249, 7
        %v2251 = vsub.s32 0, %v2250
        %v2252 = vrot.slane %v2247, %v2251
        %v2254 = vmul.f32 %v2215, %v2252
        %v2255 = vmul.f32 %v2216, %v2252
        %v2256 = vmul.f32 %v2217, %v2252
        %v2257 = vmul.f32 %v2218, %v2252
        %v2258 = vmul.f32 %v2219, %v2252
        %v2259 = vmul.f32 %v2220, %v2252
        %v2260 = vmul.f32 %v2221, %v2252
        %v2261 = vmul.f32 %v2222, %v2252
        %v2262 = vmul.f32 %v2223, %v2252
        %v2263 = vmul.f32 %v2224, %v2252
        %v2264 = vmul.f32 %v2225, %v2252
        %v2265 = vmul.f32 %v2226, %v2252
        %v2266 = vmul.f32 %v2227, %v2252
        %v2267 = vmul.f32 %v2228, %v2252
        %v2268 = vmul.f32 %v2229, %v2252
        %v2269 = vmul.f32 %v2230, %v2252
        %v2270 = vmul.f32 %v2231, %v2252
        %v2271 = vmul.f32 %v2232, %v2252
        %v2272 = vmul.f32 %v2233, %v2252
        %v2273 = vmul.f32 %v2234, %v2252
        %v2274 = vmul.f32 %v2235, %v2252
        %v2275 = vmul.f32 %v2236, %v2252
        %v2276 = vmul.f32 %v2237, %v2252
        %v2277 = vmul.f32 %v2238, %v2252
        %v2278 = vmul.f32 %v2239, %v2252
        %v2279 = vmul.f32 %v2240, %v2252
        %v2280 = vmul.f32 %v2241, %v2252
        %v2281 = vmul.f32 %v2242, %v2252
        %v2282 = vmul.f32 %v2243, %v2252
        %v2283 = vmul.f32 %v2244, %v2252
        %v2284 = vmul.f32 %v2245, %v2252
        %v2285 = vmul.f32 %v2246, %v2252
        %v2286 = vld [vmem:[%s288] sm:$0x1]
        %v2288 = vlaneseq
        %v2289 = vshrl.u32 %v2288, 7
        %v2290 = vsub.s32 0, %v2289
        %v2291 = vrot.slane %v2286, %v2290
        %v2293 = vadd.f32 %v2254, %v2291
        %v2294 = vadd.f32 %v2255, %v2291
        %v2295 = vadd.f32 %v2256, %v2291
        %v2296 = vadd.f32 %v2257, %v2291
        %v2297 = vadd.f32 %v2258, %v2291
        %v2298 = vadd.f32 %v2259, %v2291
        %v2299 = vadd.f32 %v2260, %v2291
        %v2300 = vadd.f32 %v2261, %v2291
        %v2301 = vadd.f32 %v2262, %v2291
        %v2302 = vadd.f32 %v2263, %v2291
        %v2303 = vadd.f32 %v2264, %v2291
        %v2304 = vadd.f32 %v2265, %v2291
        %v2305 = vadd.f32 %v2266, %v2291
        %v2306 = vadd.f32 %v2267, %v2291
        %v2307 = vadd.f32 %v2268, %v2291
        %v2308 = vadd.f32 %v2269, %v2291
        %v2309 = vadd.f32 %v2270, %v2291
        %v2310 = vadd.f32 %v2271, %v2291
        %v2311 = vadd.f32 %v2272, %v2291
        %v2312 = vadd.f32 %v2273, %v2291
        %v2313 = vadd.f32 %v2274, %v2291
        %v2314 = vadd.f32 %v2275, %v2291
        %v2315 = vadd.f32 %v2276, %v2291
        %v2316 = vadd.f32 %v2277, %v2291
        %v2317 = vadd.f32 %v2278, %v2291
        %v2318 = vadd.f32 %v2279, %v2291
        %v2319 = vadd.f32 %v2280, %v2291
        %v2320 = vadd.f32 %v2281, %v2291
        %v2321 = vadd.f32 %v2282, %v2291
        %v2322 = vadd.f32 %v2283, %v2291
        %v2323 = vadd.f32 %v2284, %v2291
        %v2324 = vadd.f32 %v2285, %v2291
        %v2325 = vmax.f32 %v2293, 0.0
        %v2326 = vmax.f32 %v2294, 0.0
        %v2327 = vmax.f32 %v2295, 0.0
        %v2328 = vmax.f32 %v2296, 0.0
        %v2329 = vmax.f32 %v2297, 0.0
        %v2330 = vmax.f32 %v2298, 0.0
        %v2331 = vmax.f32 %v2299, 0.0
        %v2332 = vmax.f32 %v2300, 0.0
        %v2333 = vmax.f32 %v2301, 0.0
        %v2334 = vmax.f32 %v2302, 0.0
        %v2335 = vmax.f32 %v2303, 0.0
        %v2336 = vmax.f32 %v2304, 0.0
        %v2337 = vmax.f32 %v2305, 0.0
        %v2338 = vmax.f32 %v2306, 0.0
        %v2339 = vmax.f32 %v2307, 0.0
        %v2340 = vmax.f32 %v2308, 0.0
        %v2341 = vmax.f32 %v2309, 0.0
        %v2342 = vmax.f32 %v2310, 0.0
        %v2343 = vmax.f32 %v2311, 0.0
        %v2344 = vmax.f32 %v2312, 0.0
        %v2345 = vmax.f32 %v2313, 0.0
        %v2346 = vmax.f32 %v2314, 0.0
        %v2347 = vmax.f32 %v2315, 0.0
        %v2348 = vmax.f32 %v2316, 0.0
        %v2349 = vmax.f32 %v2317, 0.0
        %v2350 = vmax.f32 %v2318, 0.0
        %v2351 = vmax.f32 %v2319, 0.0
        %v2352 = vmax.f32 %v2320, 0.0
        %v2353 = vmax.f32 %v2321, 0.0
        %v2354 = vmax.f32 %v2322, 0.0
        %v2355 = vmax.f32 %v2323, 0.0
        %v2356 = vmax.f32 %v2324, 0.0
        %2357 = vst [vmem:[%s300] sm:$0xff] %v2325
        %2358 = vst [vmem:[%s300 + $0x8] sm:$0xff] %v2326
        %2359 = vst [vmem:[%s300 + $0x10] sm:$0xff] %v2327
        %2360 = vst [vmem:[%s300 + $0x18] sm:$0xff] %v2328
        %2361 = vst [vmem:[%s300 + $0x20] sm:$0xff] %v2329
        %2362 = vst [vmem:[%s300 + $0x28] sm:$0xff] %v2330
        %2363 = vst [vmem:[%s300 + $0x30] sm:$0xff] %v2331
        %2364 = vst [vmem:[%s300 + $0x38] sm:$0xff] %v2332
        %2365 = vst [vmem:[%s300 + $0x40] sm:$0xff] %v2333
        %2366 = vst [vmem:[%s300 + $0x48] sm:$0xff] %v2334
        %2367 = vst [vmem:[%s300 + $0x50] sm:$0xff] %v2335
        %2368 = vst [vmem:[%s300 + $0x58] sm:$0xff] %v2336
        %2369 = vst [vmem:[%s300 + $0x60] sm:$0xff] %v2337
        %2370 = vst [vmem:[%s300 + $0x68] sm:$0xff] %v2338
        %2371 = vst [vmem:[%s300 + $0x70] sm:$0xff] %v2339
        %2372 = vst [vmem:[%s300 + $0x78] sm:$0xff] %v2340
        %2373 = vst [vmem:[%s300 + $0x80] sm:$0xff] %v2341
        %2374 = vst [vmem:[%s300 + $0x88] sm:$0xff] %v2342
        %2375 = vst [vmem:[%s300 + $0x90] sm:$0xff] %v2343
        %2376 = vst [vmem:[%s300 + $0x98] sm:$0xff] %v2344
        %2377 = vst [vmem:[%s300 + $0xa0] sm:$0xff] %v2345
        %2378 = vst [vmem:[%s300 + $0xa8] sm:$0xff] %v2346
        %2379 = vst [vmem:[%s300 + $0xb0] sm:$0xff] %v2347
        %2380 = vst [vmem:[%s300 + $0xb8] sm:$0xff] %v2348
        %2381 = vst [vmem:[%s300 + $0xc0] sm:$0xff] %v2349
        %2382 = vst [vmem:[%s300 + $0xc8] sm:$0xff] %v2350
        %2383 = vst [vmem:[%s300 + $0xd0] sm:$0xff] %v2351
        %2384 = vst [vmem:[%s300 + $0xd8] sm:$0xff] %v2352
        %2385 = vst [vmem:[%s300 + $0xe0] sm:$0xff] %v2353
        %2386 = vst [vmem:[%s300 + $0xe8] sm:$0xff] %v2354
        %2387 = vst [vmem:[%s300 + $0xf0] sm:$0xff] %v2355
        %2388 = vst [vmem:[%s300 + $0xf8] sm:$0xff] %v2356
      $region44: #{basic_conv2d_forward.1} parent=35 // pred_fallthru
        _
      %s2389 = smul.u32 32, %s22
      %p2390 = scmp.lt.s32.totalorder %s21, 1
      %s2391 = scalar_select %p2390, %s21, 1
      %p2392 = scmp.lt.s32.totalorder %s2389, 31
      %s2393 = scalar_select %p2392, %s2389, 31
      %p2394 = scmp.lt.s32.totalorder %s23, 0
      %s2395 = scalar_select %p2394, %s23, 0
      %s2396 = sadd.s32 %s2395, %s2393
      %s2397 = smul.addr %s2391, 32
      %s2398 = sadd.s32 %s2396, %s2397
      %s2399 = smul.addr %s2398, 8
      %s2400 = scalar_lea.vmem %s4, %s2399
      // Predicated region
      $region45: #{basic_conv2d_forward.1} parent=35 // pred_check
        %p2401 = pneg %p169
      $region46: #{basic_conv2d_forward.1} parent=35 // pred_check_branch
        %2403 = sbr.rel (%p2401) target = $region48
      $region47: #{basic_conv2d_forward.1} parent=35 // pred_region
        %s2404 = smul.u32 32, %s22
      $region48: #{basic_conv2d_forward.1} parent=35 // pred_fallthru
        _
    $region36: #{basic_conv2d_forward.1} parent=5 // pred_fallthru
      _
    %p2405 = scmp.le.s32.totalorder 2, %s10
    // Predicated region
    $region49: #{basic_conv2d_forward.1} parent=5 // pred_check
      %p2406 = pneg %p2405
    $region50: #{basic_conv2d_forward.1} parent=5 // pred_check_branch
      %2408 = sbr.rel (%p2406) target = $region52
    $region51: #{basic_conv2d_forward.1} parent=5 // pred_region
      %s2409 = ssub.s32 %s10, 2
      // Predicated region
      $region53: #{basic_conv2d_forward.1} parent=51 // pred_check
        %p2410 = pneg %p175
      $region54: #{basic_conv2d_forward.1} parent=51 // pred_check_branch
        %2412 = sbr.rel (%p2410) target = $region56
      $region55: #{basic_conv2d_forward.1} parent=51 // pred_region
        %s2413 = smul.u32 32, %s26
        %p2414 = scmp.lt.s32.totalorder %s25, 1
        %s2415 = scalar_select %p2414, %s25, 1
        %p2416 = scmp.lt.s32.totalorder %s2413, 31
        %s2417 = scalar_select %p2416, %s2413, 31
        %p2418 = scmp.lt.s32.totalorder %s27, 0
        %s2419 = scalar_select %p2418, %s27, 0
        %s2420 = sadd.s32 %s2419, %s2417
        %s2421 = smul.addr %s2415, 32
        %s2422 = sadd.s32 %s2420, %s2421
        %s2423 = smul.addr %s2422, 8
        %s2424 = scalar_lea.vmem %s4, %s2423
      $region56: #{basic_conv2d_forward.1} parent=51 // pred_fallthru
        _
    $region52: #{basic_conv2d_forward.1} parent=5 // pred_fallthru
      _
  $region6: #{basic_conv2d_forward.1} parent=0 // loop_footer
    %s14 = sadd.s32 1, %s10
  $region7: #{basic_conv2d_forward.1} parent=0 // loop_footer_branch
    %9 = sbr.rel target = $region3
  $region8: #{basic_conv2d_forward.1} parent=0 // loop_exit
    _

</llo_original>
